<compile_context>
chip_gen: v7x
topology: tpu7x:2x2x1
jax: 0.10.0
libtpu: 0.0.40
codegen_flags: <defaults>
</compile_context>

<pallas_src>
import functools

import jax
import jax.numpy as jnp
from jax import lax
from jax.experimental import pallas as pl
from jax.experimental.pallas import tpu as pltpu

LANE = 128  # lane-pad feature / hidden / output dims to multiples of 128


def _round_up(x, m):
    return (x + m - 1) // m * m


# ----------------------------------------------------------------------------
# Fused per-layer kernel.
#   feat:   (N, Dp)        full (lane-padded) feature matrix, resident in VMEM
#   sel:    (S, Tn, N)     0/1 neighbor-selection matrices (sampling mask folded in)
#   w_agg:  (Dp, Da) b_agg: (1, Da)     aggregator fc1
#   w_self: (Dp, Hp) w_aggfc: (Da, Hp)  fc weight split into [self | agg] halves
#   b_fc:   (1, Hp)
#   gamma/beta/mean/var: (1, Hp)        BatchNorm1d eval stats (non-final layers)
#   out:    (Tn, Hp)
# ----------------------------------------------------------------------------
def sage_layer_kernel(*refs, is_last):
    if is_last:
        (feat_ref, sel_ref, wagg_ref, bagg_ref,
         wself_ref, waggfc_ref, bfc_ref, out_ref) = refs
    else:
        (feat_ref, sel_ref, wagg_ref, bagg_ref,
         wself_ref, waggfc_ref, bfc_ref,
         gamma_ref, beta_ref, mean_ref, var_ref, out_ref) = refs

    tn = out_ref.shape[0]
    s = sel_ref.shape[0]

    # Aggregator MLP over ALL nodes (gather commutes with the row-wise MLP).
    feat_bf = feat_ref[...].astype(jnp.bfloat16)
    hn = jnp.dot(feat_bf, wagg_ref[...], preferred_element_type=jnp.float32)
    hn = jnp.maximum(hn + bagg_ref[...], 0.0)              # aggregator ReLU, hn >= 0
    hn_bf = hn.astype(jnp.bfloat16)

    # Masked max-pool over sampled neighbors: sel[j] @ hn selects (or zeros out)
    # one sampled neighbor's hidden row per node.  hn >= 0 so the zero rows from
    # masked slots never win the max, and all-masked nodes get a zero aggregate.
    agg = jnp.zeros((tn, hn.shape[1]), jnp.float32)
    for j in range(s):                                     # static unroll, S is small
        agg = jnp.maximum(
            agg, jnp.dot(sel_ref[j], hn_bf, preferred_element_type=jnp.float32))

    # fc layer with the concat folded into split weights.
    row0 = pl.multiple_of(pl.program_id(0) * tn, tn)
    self_bf = feat_ref[pl.ds(row0, tn), :].astype(jnp.bfloat16)
    out = (jnp.dot(self_bf, wself_ref[...], preferred_element_type=jnp.float32)
           + jnp.dot(agg.astype(jnp.bfloat16), waggfc_ref[...],
                     preferred_element_type=jnp.float32)
           + bfc_ref[...])

    if not is_last:
        out = jnp.maximum(out, 0.0)                                      # ReLU
        out = (out - mean_ref[...]) * lax.rsqrt(var_ref[...] + 1e-5)
        out = out * gamma_ref[...] + beta_ref[...]                       # BN (eval)
        # TODO(synk): training-mode Dropout omitted (eval-mode Dropout is identity).
        norm = jnp.sqrt(jnp.sum(out * out, axis=1, keepdims=True))
        out = out * pl.reciprocal(norm + 1e-6, approx=True)              # L2 normalize

    out_ref[...] = out


def sage_layer(feat, sel, w_agg, b_agg, w_self, w_aggfc, b_fc, bn=None, *,
               tile_n=None):
    n, dp = feat.shape
    da = w_agg.shape[1]
    hp = w_self.shape[1]
    s = sel.shape[0]
    if tile_n is None:
        tile_n = n                       # small graphs: one big grid step
    assert n % tile_n == 0

    is_last = bn is None
    kernel = functools.partial(sage_layer_kernel, is_last=is_last)

    in_specs = [
        pl.BlockSpec((n, dp), lambda i: (0, 0)),            # full features, resident
        pl.BlockSpec((s, tile_n, n), lambda i: (0, i, 0)),  # selection mats for tile
        pl.BlockSpec((dp, da), lambda i: (0, 0)),
        pl.BlockSpec((1, da), lambda i: (0, 0)),
        pl.BlockSpec((dp, hp), lambda i: (0, 0)),
        pl.BlockSpec((da, hp), lambda i: (0, 0)),
        pl.BlockSpec((1, hp), lambda i: (0, 0)),
    ]
    args = [feat, sel, w_agg, b_agg, w_self, w_aggfc, b_fc]
    if not is_last:
        in_specs += [pl.BlockSpec((1, hp), lambda i: (0, 0))] * 4
        args += [bn["gamma"], bn["beta"], bn["mean"], bn["var"]]

    return pl.pallas_call(
        kernel,
        out_shape=jax.ShapeDtypeStruct((n, hp), jnp.float32),
        grid=(n // tile_n,),
        in_specs=in_specs,
        out_specs=pl.BlockSpec((tile_n, hp), lambda i: (i, 0)),
        compiler_params=pltpu.CompilerParams(
            dimension_semantics=("parallel",)),
    )(*args)


# ----------------------------------------------------------------------------
# GraphSAGE forward (full-batch computation graph; neighbor sampling precomputed
# host-side and folded into the 0/1 selection matrices `sel`).
# ----------------------------------------------------------------------------
def graphsage_forward(features_p, sel, params):
    num_layers = len(params["fc_wself"])
    out = features_p
    for k in range(num_layers):
        bn = None
        if k + 1 < num_layers:
            bn = {"gamma": params["bn_gamma"][k], "beta": params["bn_beta"][k],
                  "mean": params["bn_mean"][k], "var": params["bn_var"][k]}
        out = sage_layer(out, sel,
                         params["agg_w"][k], params["agg_b"][k],
                         params["fc_wself"][k], params["fc_wagg"][k],
                         params["fc_b"][k], bn=bn)
    return out


# ----------------------------------------------------------------------------
# Host-side glue: parameter init, lane padding, selection-matrix construction.
# ----------------------------------------------------------------------------
def _linear_init(key, fan_in, fan_out):
    kw, kb = jax.random.split(key)
    bound = 1.0 / float(fan_in) ** 0.5
    w = jax.random.uniform(kw, (fan_in, fan_out), jnp.float32, -bound, bound)
    b = jax.random.uniform(kb, (1, fan_out), jnp.float32, -bound, bound)
    return w, b


def _pad2(x, rows, cols, dtype=None):
    x = jnp.pad(x, ((0, rows - x.shape[0]), (0, cols - x.shape[1])))
    return x if dtype is None else x.astype(dtype)


def build_selection(neigh_idx, mask, n):
    # sel[s, i, j] = mask[i, s] * (neigh_idx[i, s] == j); values are exact in bf16.
    # TODO(synk): for large N, replace the O(N^2) selection matrices with an
    # in-kernel scalar-prefetch DMA gather of neighbor rows.
    onehot = jax.nn.one_hot(neigh_idx, n, dtype=jnp.float32)        # (N, S, N)
    sel = (onehot * mask[:, :, None]).transpose(1, 0, 2)            # (S, N, N)
    return sel.astype(jnp.bfloat16)


if __name__ == "__main__":
    key = jax.random.PRNGKey(0)

    # model config: input_dim=32, hidden_dims=[32], output_dim=16,
    # MaxPoolAggregator, num_samples=[5, 5]  -> num_layers = 2
    N = 64
    INPUT_DIM = 32
    HIDDEN = 32
    OUTPUT_DIM = 16
    S = 5

    Dp = _round_up(INPUT_DIM, LANE)    # 128
    Hp = _round_up(HIDDEN, LANE)       # 128
    Op = _round_up(OUTPUT_DIM, LANE)   # 128

    (k_feat, k_deg, k_nbr,
     k_agg0, k_agg1, k_fc0, k_fc1) = jax.random.split(key, 7)

    # node features (lane-padded with zeros)
    features = jax.random.normal(k_feat, (N, INPUT_DIM), jnp.float32)
    features_p = _pad2(features, N, Dp)

    # deterministic synthetic adjacency: degrees in [0, 8), sampled/padded to S
    deg = jax.random.randint(k_deg, (N,), 0, 8)
    neigh_idx = jax.random.randint(k_nbr, (N, S), 0, N).astype(jnp.int32)
    mask = (jnp.arange(S)[None, :] < deg[:, None]).astype(jnp.float32)  # (N, S)
    sel = build_selection(neigh_idx, mask, N)                           # (S, N, N)

    # parameters (deterministic init; shapes from GraphSAGE.__init__ with c=2),
    # lane-padded; matmul weights stored in bf16 (f32 accumulation in-kernel)
    agg0_w, agg0_b = _linear_init(k_agg0, INPUT_DIM, INPUT_DIM)
    agg1_w, agg1_b = _linear_init(k_agg1, HIDDEN, HIDDEN)
    fc0_w, fc0_b = _linear_init(k_fc0, 2 * INPUT_DIM, HIDDEN)
    fc1_w, fc1_b = _linear_init(k_fc1, 2 * HIDDEN, OUTPUT_DIM)

    params = {
        "agg_w": [_pad2(agg0_w, Dp, Dp, jnp.bfloat16),
                  _pad2(agg1_w, Hp, Hp, jnp.bfloat16)],
        "agg_b": [_pad2(agg0_b, 1, Dp), _pad2(agg1_b, 1, Hp)],
        # fc weights split into self / aggregate halves (concat folded away)
        "fc_wself": [_pad2(fc0_w[:INPUT_DIM], Dp, Hp, jnp.bfloat16),
                     _pad2(fc1_w[:HIDDEN], Hp, Op, jnp.bfloat16)],
        "fc_wagg": [_pad2(fc0_w[INPUT_DIM:], Dp, Hp, jnp.bfloat16),
                    _pad2(fc1_w[HIDDEN:], Hp, Op, jnp.bfloat16)],
        "fc_b": [_pad2(fc0_b, 1, Hp), _pad2(fc1_b, 1, Op)],
        # BatchNorm1d(HIDDEN) default init / running stats (eval mode);
        # padded lanes stay exactly zero through the whole pipeline.
        "bn_gamma": [jnp.ones((1, Hp), jnp.float32)],
        "bn_beta": [jnp.zeros((1, Hp), jnp.float32)],
        "bn_mean": [jnp.zeros((1, Hp), jnp.float32)],
        "bn_var": [jnp.ones((1, Hp), jnp.float32)],
    }

    out_p = jax.jit(graphsage_forward)(features_p, sel, params)
    out_p = jax.block_until_ready(out_p)
    out = out_p[:, :OUTPUT_DIM]          # strip lane padding

    assert out.shape == (N, OUTPUT_DIM), out.shape
    assert out.dtype == jnp.float32
    assert bool(jnp.all(jnp.isfinite(out)))
    print("KERNEL_OK")
</pallas_src>

<mosaic_0001>
module attributes {stable_mosaic.version = 11 : i64} {
  func.func @sage_layer_kernel(%arg0: i32, %arg1: memref<64x128xf32, #tpu.memory_space<vmem>>, %arg2: memref<5x64x64xbf16, #tpu.memory_space<vmem>>, %arg3: memref<128x128xbf16, #tpu.memory_space<vmem>>, %arg4: memref<1x128xf32, #tpu.memory_space<vmem>>, %arg5: memref<128x128xbf16, #tpu.memory_space<vmem>>, %arg6: memref<128x128xbf16, #tpu.memory_space<vmem>>, %arg7: memref<1x128xf32, #tpu.memory_space<vmem>>, %arg8: memref<64x128xf32, #tpu.memory_space<vmem>>) attributes {dimension_semantics = [#tpu.dimension_semantics<parallel>], iteration_bounds = array<i64: 1>, scalar_prefetch = 0 : i64, scratch_operands = 0 : i64, tpu.core_type = #tpu.core_type<tc>, window_params = [{pipeline_mode = #tpu.pipeline_mode<synchronous>, transform_indices = @transform_0, window_bounds = array<i64: 64, 128>}, {transform_indices = @transform_1, window_bounds = array<i64: 5, 64, 64>}, {pipeline_mode = #tpu.pipeline_mode<synchronous>, transform_indices = @transform_2, window_bounds = array<i64: 128, 128>}, {pipeline_mode = #tpu.pipeline_mode<synchronous>, transform_indices = @transform_3, window_bounds = array<i64: 1, 128>}, {pipeline_mode = #tpu.pipeline_mode<synchronous>, transform_indices = @transform_4, window_bounds = array<i64: 128, 128>}, {pipeline_mode = #tpu.pipeline_mode<synchronous>, transform_indices = @transform_5, window_bounds = array<i64: 128, 128>}, {pipeline_mode = #tpu.pipeline_mode<synchronous>, transform_indices = @transform_6, window_bounds = array<i64: 1, 128>}, {transform_indices = @transform_7, window_bounds = array<i64: 64, 128>}]} {
    %c0 = arith.constant 0 : index
    %c0_0 = arith.constant 0 : index
    %0 = vector.load %arg1[%c0, %c0_0] : memref<64x128xf32, #tpu.memory_space<vmem>>, vector<64x128xf32>
    %1 = arith.truncf %0 : vector<64x128xf32> to vector<64x128xbf16>
    %c0_1 = arith.constant 0 : index
    %c0_2 = arith.constant 0 : index
    %2 = vector.load %arg3[%c0_1, %c0_2] : memref<128x128xbf16, #tpu.memory_space<vmem>>, vector<128x128xbf16>
    %cst = arith.constant dense<0.000000e+00> : vector<64x128xf32>
    %3 = tpu.matmul %1, %2, %cst {dimension_numbers = #tpu.dot_dimension_numbers<[1], [0], [0], [1], [0, 0, 1, 1], [], []>} : vector<64x128xbf16>, vector<128x128xbf16>, vector<64x128xf32> -> vector<64x128xf32>
    %c0_3 = arith.constant 0 : index
    %c0_4 = arith.constant 0 : index
    %4 = vector.load %arg4[%c0_3, %c0_4] : memref<1x128xf32, #tpu.memory_space<vmem>>, vector<1x128xf32>
    %5 = vector.broadcast %4 : vector<1x128xf32> to vector<64x128xf32>
    %6 = arith.addf %3, %5 : vector<64x128xf32>
    %cst_5 = arith.constant 0.000000e+00 : f32
    %7 = vector.broadcast %cst_5 : f32 to vector<64x128xf32>
    %8 = arith.maximumf %6, %7 : vector<64x128xf32>
    %9 = arith.truncf %8 : vector<64x128xf32> to vector<64x128xbf16>
    %cst_6 = arith.constant 0.000000e+00 : f32
    %10 = vector.broadcast %cst_6 : f32 to vector<64x128xf32>
    %c0_7 = arith.constant 0 : index
    %c0_8 = arith.constant 0 : index
    %c0_9 = arith.constant 0 : index
    %11 = vector.load %arg2[%c0_7, %c0_8, %c0_9] : memref<5x64x64xbf16, #tpu.memory_space<vmem>>, vector<1x64x64xbf16>
    %12 = vector.shape_cast %11 : vector<1x64x64xbf16> to vector<64x64xbf16>
    %cst_10 = arith.constant dense<0.000000e+00> : vector<64x128xf32>
    %13 = tpu.matmul %12, %9, %cst_10 {dimension_numbers = #tpu.dot_dimension_numbers<[1], [0], [0], [1], [0, 0, 1, 1], [], []>} : vector<64x64xbf16>, vector<64x128xbf16>, vector<64x128xf32> -> vector<64x128xf32>
    %14 = arith.maximumf %10, %13 : vector<64x128xf32>
    %c1 = arith.constant 1 : index
    %c0_11 = arith.constant 0 : index
    %c0_12 = arith.constant 0 : index
    %15 = vector.load %arg2[%c1, %c0_11, %c0_12] : memref<5x64x64xbf16, #tpu.memory_space<vmem>>, vector<1x64x64xbf16>
    %16 = vector.shape_cast %15 : vector<1x64x64xbf16> to vector<64x64xbf16>
    %cst_13 = arith.constant dense<0.000000e+00> : vector<64x128xf32>
    %17 = tpu.matmul %16, %9, %cst_13 {dimension_numbers = #tpu.dot_dimension_numbers<[1], [0], [0], [1], [0, 0, 1, 1], [], []>} : vector<64x64xbf16>, vector<64x128xbf16>, vector<64x128xf32> -> vector<64x128xf32>
    %18 = arith.maximumf %14, %17 : vector<64x128xf32>
    %c2 = arith.constant 2 : index
    %c0_14 = arith.constant 0 : index
    %c0_15 = arith.constant 0 : index
    %19 = vector.load %arg2[%c2, %c0_14, %c0_15] : memref<5x64x64xbf16, #tpu.memory_space<vmem>>, vector<1x64x64xbf16>
    %20 = vector.shape_cast %19 : vector<1x64x64xbf16> to vector<64x64xbf16>
    %cst_16 = arith.constant dense<0.000000e+00> : vector<64x128xf32>
    %21 = tpu.matmul %20, %9, %cst_16 {dimension_numbers = #tpu.dot_dimension_numbers<[1], [0], [0], [1], [0, 0, 1, 1], [], []>} : vector<64x64xbf16>, vector<64x128xbf16>, vector<64x128xf32> -> vector<64x128xf32>
    %22 = arith.maximumf %18, %21 : vector<64x128xf32>
    %c3 = arith.constant 3 : index
    %c0_17 = arith.constant 0 : index
    %c0_18 = arith.constant 0 : index
    %23 = vector.load %arg2[%c3, %c0_17, %c0_18] : memref<5x64x64xbf16, #tpu.memory_space<vmem>>, vector<1x64x64xbf16>
    %24 = vector.shape_cast %23 : vector<1x64x64xbf16> to vector<64x64xbf16>
    %cst_19 = arith.constant dense<0.000000e+00> : vector<64x128xf32>
    %25 = tpu.matmul %24, %9, %cst_19 {dimension_numbers = #tpu.dot_dimension_numbers<[1], [0], [0], [1], [0, 0, 1, 1], [], []>} : vector<64x64xbf16>, vector<64x128xbf16>, vector<64x128xf32> -> vector<64x128xf32>
    %26 = arith.maximumf %22, %25 : vector<64x128xf32>
    %c4 = arith.constant 4 : index
    %c0_20 = arith.constant 0 : index
    %c0_21 = arith.constant 0 : index
    %27 = vector.load %arg2[%c4, %c0_20, %c0_21] : memref<5x64x64xbf16, #tpu.memory_space<vmem>>, vector<1x64x64xbf16>
    %28 = vector.shape_cast %27 : vector<1x64x64xbf16> to vector<64x64xbf16>
    %cst_22 = arith.constant dense<0.000000e+00> : vector<64x128xf32>
    %29 = tpu.matmul %28, %9, %cst_22 {dimension_numbers = #tpu.dot_dimension_numbers<[1], [0], [0], [1], [0, 0, 1, 1], [], []>} : vector<64x64xbf16>, vector<64x128xbf16>, vector<64x128xf32> -> vector<64x128xf32>
    %30 = arith.maximumf %26, %29 : vector<64x128xf32>
    %c64_i32 = arith.constant 64 : i32
    %31 = arith.muli %arg0, %c64_i32 : i32
    %32 = tpu.assume_multiple %31, 64 : i32
    %33 = arith.index_cast %32 : i32 to index
    %c0_23 = arith.constant 0 : index
    %34 = vector.load %arg1[%33, %c0_23] : memref<64x128xf32, #tpu.memory_space<vmem>>, vector<64x128xf32>
    %35 = arith.truncf %34 : vector<64x128xf32> to vector<64x128xbf16>
    %c0_24 = arith.constant 0 : index
    %c0_25 = arith.constant 0 : index
    %36 = vector.load %arg5[%c0_24, %c0_25] : memref<128x128xbf16, #tpu.memory_space<vmem>>, vector<128x128xbf16>
    %cst_26 = arith.constant dense<0.000000e+00> : vector<64x128xf32>
    %37 = tpu.matmul %35, %36, %cst_26 {dimension_numbers = #tpu.dot_dimension_numbers<[1], [0], [0], [1], [0, 0, 1, 1], [], []>} : vector<64x128xbf16>, vector<128x128xbf16>, vector<64x128xf32> -> vector<64x128xf32>
    %38 = arith.truncf %30 : vector<64x128xf32> to vector<64x128xbf16>
    %c0_27 = arith.constant 0 : index
    %c0_28 = arith.constant 0 : index
    %39 = vector.load %arg6[%c0_27, %c0_28] : memref<128x128xbf16, #tpu.memory_space<vmem>>, vector<128x128xbf16>
    %cst_29 = arith.constant dense<0.000000e+00> : vector<64x128xf32>
    %40 = tpu.matmul %38, %39, %cst_29 {dimension_numbers = #tpu.dot_dimension_numbers<[1], [0], [0], [1], [0, 0, 1, 1], [], []>} : vector<64x128xbf16>, vector<128x128xbf16>, vector<64x128xf32> -> vector<64x128xf32>
    %41 = arith.addf %37, %40 : vector<64x128xf32>
    %c0_30 = arith.constant 0 : index
    %c0_31 = arith.constant 0 : index
    %42 = vector.load %arg7[%c0_30, %c0_31] : memref<1x128xf32, #tpu.memory_space<vmem>>, vector<1x128xf32>
    %43 = vector.broadcast %42 : vector<1x128xf32> to vector<64x128xf32>
    %44 = arith.addf %41, %43 : vector<64x128xf32>
    %c0_32 = arith.constant 0 : index
    %c0_33 = arith.constant 0 : index
    %45 = vector.load %arg8[%c0_32, %c0_33] : memref<64x128xf32, #tpu.memory_space<vmem>>, vector<64x128xf32>
    tpu.vector_store %arg8[%c0_32, %c0_33], %44 {strides = array<i32>} : memref<64x128xf32, #tpu.memory_space<vmem>>, vector<64x128xf32>,
    return
  }
  func.func @transform_0(%arg0: i32) -> (i32, i32) {
    %c0_i32 = arith.constant 0 : i32
    %c0_i32_0 = arith.constant 0 : i32
    %c0_i32_1 = arith.constant 0 : i32
    return %c0_i32, %c0_i32_0 : i32, i32
  }
  func.func @transform_1(%arg0: i32) -> (i32, i32, i32) {
    %c0_i32 = arith.constant 0 : i32
    %c0_i32_0 = arith.constant 0 : i32
    %c0_i32_1 = arith.constant 0 : i32
    return %c0_i32, %arg0, %c0_i32_0 : i32, i32, i32
  }
  func.func @transform_2(%arg0: i32) -> (i32, i32) {
    %c0_i32 = arith.constant 0 : i32
    %c0_i32_0 = arith.constant 0 : i32
    %c0_i32_1 = arith.constant 0 : i32
    return %c0_i32, %c0_i32_0 : i32, i32
  }
  func.func @transform_3(%arg0: i32) -> (i32, i32) {
    %c0_i32 = arith.constant 0 : i32
    %c0_i32_0 = arith.constant 0 : i32
    %c0_i32_1 = arith.constant 0 : i32
    return %c0_i32, %c0_i32_0 : i32, i32
  }
  func.func @transform_4(%arg0: i32) -> (i32, i32) {
    %c0_i32 = arith.constant 0 : i32
    %c0_i32_0 = arith.constant 0 : i32
    %c0_i32_1 = arith.constant 0 : i32
    return %c0_i32, %c0_i32_0 : i32, i32
  }
  func.func @transform_5(%arg0: i32) -> (i32, i32) {
    %c0_i32 = arith.constant 0 : i32
    %c0_i32_0 = arith.constant 0 : i32
    %c0_i32_1 = arith.constant 0 : i32
    return %c0_i32, %c0_i32_0 : i32, i32
  }
  func.func @transform_6(%arg0: i32) -> (i32, i32) {
    %c0_i32 = arith.constant 0 : i32
    %c0_i32_0 = arith.constant 0 : i32
    %c0_i32_1 = arith.constant 0 : i32
    return %c0_i32, %c0_i32_0 : i32, i32
  }
  func.func @transform_7(%arg0: i32) -> (i32, i32) {
    %c0_i32 = arith.constant 0 : i32
    %c0_i32_0 = arith.constant 0 : i32
    return %arg0, %c0_i32 : i32, i32
  }
}

module attributes {stable_mosaic.version = 11 : i64} {
  func.func @sage_layer_kernel(%arg0: i32, %arg1: memref<64x128xf32, #tpu.memory_space<vmem>>, %arg2: memref<5x64x64xbf16, #tpu.memory_space<vmem>>, %arg3: memref<128x128xbf16, #tpu.memory_space<vmem>>, %arg4: memref<1x128xf32, #tpu.memory_space<vmem>>, %arg5: memref<128x128xbf16, #tpu.memory_space<vmem>>, %arg6: memref<128x128xbf16, #tpu.memory_space<vmem>>, %arg7: memref<1x128xf32, #tpu.memory_space<vmem>>, %arg8: memref<1x128xf32, #tpu.memory_space<vmem>>, %arg9: memref<1x128xf32, #tpu.memory_space<vmem>>, %arg10: memref<1x128xf32, #tpu.memory_space<vmem>>, %arg11: memref<1x128xf32, #tpu.memory_space<vmem>>, %arg12: memref<64x128xf32, #tpu.memory_space<vmem>>) attributes {dimension_semantics = [#tpu.dimension_semantics<parallel>], iteration_bounds = array<i64: 1>, scalar_prefetch = 0 : i64, scratch_operands = 0 : i64, tpu.core_type = #tpu.core_type<tc>, window_params = [{pipeline_mode = #tpu.pipeline_mode<synchronous>, transform_indices = @transform_0, window_bounds = array<i64: 64, 128>}, {transform_indices = @transform_1, window_bounds = array<i64: 5, 64, 64>}, {pipeline_mode = #tpu.pipeline_mode<synchronous>, transform_indices = @transform_2, window_bounds = array<i64: 128, 128>}, {pipeline_mode = #tpu.pipeline_mode<synchronous>, transform_indices = @transform_3, window_bounds = array<i64: 1, 128>}, {pipeline_mode = #tpu.pipeline_mode<synchronous>, transform_indices = @transform_4, window_bounds = array<i64: 128, 128>}, {pipeline_mode = #tpu.pipeline_mode<synchronous>, transform_indices = @transform_5, window_bounds = array<i64: 128, 128>}, {pipeline_mode = #tpu.pipeline_mode<synchronous>, transform_indices = @transform_6, window_bounds = array<i64: 1, 128>}, {pipeline_mode = #tpu.pipeline_mode<synchronous>, transform_indices = @transform_7, window_bounds = array<i64: 1, 128>}, {pipeline_mode = #tpu.pipeline_mode<synchronous>, transform_indices = @transform_8, window_bounds = array<i64: 1, 128>}, {pipeline_mode = #tpu.pipeline_mode<synchronous>, transform_indices = @transform_9, window_bounds = array<i64: 1, 128>}, {pipeline_mode = #tpu.pipeline_mode<synchronous>, transform_indices = @transform_10, window_bounds = array<i64: 1, 128>}, {transform_indices = @transform_11, window_bounds = array<i64: 64, 128>}]} {
    %c0 = arith.constant 0 : index
    %c0_0 = arith.constant 0 : index
    %0 = vector.load %arg1[%c0, %c0_0] : memref<64x128xf32, #tpu.memory_space<vmem>>, vector<64x128xf32>
    %1 = arith.truncf %0 : vector<64x128xf32> to vector<64x128xbf16>
    %c0_1 = arith.constant 0 : index
    %c0_2 = arith.constant 0 : index
    %2 = vector.load %arg3[%c0_1, %c0_2] : memref<128x128xbf16, #tpu.memory_space<vmem>>, vector<128x128xbf16>
    %cst = arith.constant dense<0.000000e+00> : vector<64x128xf32>
    %3 = tpu.matmul %1, %2, %cst {dimension_numbers = #tpu.dot_dimension_numbers<[1], [0], [0], [1], [0, 0, 1, 1], [], []>} : vector<64x128xbf16>, vector<128x128xbf16>, vector<64x128xf32> -> vector<64x128xf32>
    %c0_3 = arith.constant 0 : index
    %c0_4 = arith.constant 0 : index
    %4 = vector.load %arg4[%c0_3, %c0_4] : memref<1x128xf32, #tpu.memory_space<vmem>>, vector<1x128xf32>
    %5 = vector.broadcast %4 : vector<1x128xf32> to vector<64x128xf32>
    %6 = arith.addf %3, %5 : vector<64x128xf32>
    %cst_5 = arith.constant 0.000000e+00 : f32
    %7 = vector.broadcast %cst_5 : f32 to vector<64x128xf32>
    %8 = arith.maximumf %6, %7 : vector<64x128xf32>
    %9 = arith.truncf %8 : vector<64x128xf32> to vector<64x128xbf16>
    %cst_6 = arith.constant 0.000000e+00 : f32
    %10 = vector.broadcast %cst_6 : f32 to vector<64x128xf32>
    %c0_7 = arith.constant 0 : index
    %c0_8 = arith.constant 0 : index
    %c0_9 = arith.constant 0 : index
    %11 = vector.load %arg2[%c0_7, %c0_8, %c0_9] : memref<5x64x64xbf16, #tpu.memory_space<vmem>>, vector<1x64x64xbf16>
    %12 = vector.shape_cast %11 : vector<1x64x64xbf16> to vector<64x64xbf16>
    %cst_10 = arith.constant dense<0.000000e+00> : vector<64x128xf32>
    %13 = tpu.matmul %12, %9, %cst_10 {dimension_numbers = #tpu.dot_dimension_numbers<[1], [0], [0], [1], [0, 0, 1, 1], [], []>} : vector<64x64xbf16>, vector<64x128xbf16>, vector<64x128xf32> -> vector<64x128xf32>
    %14 = arith.maximumf %10, %13 : vector<64x128xf32>
    %c1 = arith.constant 1 : index
    %c0_11 = arith.constant 0 : index
    %c0_12 = arith.constant 0 : index
    %15 = vector.load %arg2[%c1, %c0_11, %c0_12] : memref<5x64x64xbf16, #tpu.memory_space<vmem>>, vector<1x64x64xbf16>
    %16 = vector.shape_cast %15 : vector<1x64x64xbf16> to vector<64x64xbf16>
    %cst_13 = arith.constant dense<0.000000e+00> : vector<64x128xf32>
    %17 = tpu.matmul %16, %9, %cst_13 {dimension_numbers = #tpu.dot_dimension_numbers<[1], [0], [0], [1], [0, 0, 1, 1], [], []>} : vector<64x64xbf16>, vector<64x128xbf16>, vector<64x128xf32> -> vector<64x128xf32>
    %18 = arith.maximumf %14, %17 : vector<64x128xf32>
    %c2 = arith.constant 2 : index
    %c0_14 = arith.constant 0 : index
    %c0_15 = arith.constant 0 : index
    %19 = vector.load %arg2[%c2, %c0_14, %c0_15] : memref<5x64x64xbf16, #tpu.memory_space<vmem>>, vector<1x64x64xbf16>
    %20 = vector.shape_cast %19 : vector<1x64x64xbf16> to vector<64x64xbf16>
    %cst_16 = arith.constant dense<0.000000e+00> : vector<64x128xf32>
    %21 = tpu.matmul %20, %9, %cst_16 {dimension_numbers = #tpu.dot_dimension_numbers<[1], [0], [0], [1], [0, 0, 1, 1], [], []>} : vector<64x64xbf16>, vector<64x128xbf16>, vector<64x128xf32> -> vector<64x128xf32>
    %22 = arith.maximumf %18, %21 : vector<64x128xf32>
    %c3 = arith.constant 3 : index
    %c0_17 = arith.constant 0 : index
    %c0_18 = arith.constant 0 : index
    %23 = vector.load %arg2[%c3, %c0_17, %c0_18] : memref<5x64x64xbf16, #tpu.memory_space<vmem>>, vector<1x64x64xbf16>
    %24 = vector.shape_cast %23 : vector<1x64x64xbf16> to vector<64x64xbf16>
    %cst_19 = arith.constant dense<0.000000e+00> : vector<64x128xf32>
    %25 = tpu.matmul %24, %9, %cst_19 {dimension_numbers = #tpu.dot_dimension_numbers<[1], [0], [0], [1], [0, 0, 1, 1], [], []>} : vector<64x64xbf16>, vector<64x128xbf16>, vector<64x128xf32> -> vector<64x128xf32>
    %26 = arith.maximumf %22, %25 : vector<64x128xf32>
    %c4 = arith.constant 4 : index
    %c0_20 = arith.constant 0 : index
    %c0_21 = arith.constant 0 : index
    %27 = vector.load %arg2[%c4, %c0_20, %c0_21] : memref<5x64x64xbf16, #tpu.memory_space<vmem>>, vector<1x64x64xbf16>
    %28 = vector.shape_cast %27 : vector<1x64x64xbf16> to vector<64x64xbf16>
    %cst_22 = arith.constant dense<0.000000e+00> : vector<64x128xf32>
    %29 = tpu.matmul %28, %9, %cst_22 {dimension_numbers = #tpu.dot_dimension_numbers<[1], [0], [0], [1], [0, 0, 1, 1], [], []>} : vector<64x64xbf16>, vector<64x128xbf16>, vector<64x128xf32> -> vector<64x128xf32>
    %30 = arith.maximumf %26, %29 : vector<64x128xf32>
    %c64_i32 = arith.constant 64 : i32
    %31 = arith.muli %arg0, %c64_i32 : i32
    %32 = tpu.assume_multiple %31, 64 : i32
    %33 = arith.index_cast %32 : i32 to index
    %c0_23 = arith.constant 0 : index
    %34 = vector.load %arg1[%33, %c0_23] : memref<64x128xf32, #tpu.memory_space<vmem>>, vector<64x128xf32>
    %35 = arith.truncf %34 : vector<64x128xf32> to vector<64x128xbf16>
    %c0_24 = arith.constant 0 : index
    %c0_25 = arith.constant 0 : index
    %36 = vector.load %arg5[%c0_24, %c0_25] : memref<128x128xbf16, #tpu.memory_space<vmem>>, vector<128x128xbf16>
    %cst_26 = arith.constant dense<0.000000e+00> : vector<64x128xf32>
    %37 = tpu.matmul %35, %36, %cst_26 {dimension_numbers = #tpu.dot_dimension_numbers<[1], [0], [0], [1], [0, 0, 1, 1], [], []>} : vector<64x128xbf16>, vector<128x128xbf16>, vector<64x128xf32> -> vector<64x128xf32>
    %38 = arith.truncf %30 : vector<64x128xf32> to vector<64x128xbf16>
    %c0_27 = arith.constant 0 : index
    %c0_28 = arith.constant 0 : index
    %39 = vector.load %arg6[%c0_27, %c0_28] : memref<128x128xbf16, #tpu.memory_space<vmem>>, vector<128x128xbf16>
    %cst_29 = arith.constant dense<0.000000e+00> : vector<64x128xf32>
    %40 = tpu.matmul %38, %39, %cst_29 {dimension_numbers = #tpu.dot_dimension_numbers<[1], [0], [0], [1], [0, 0, 1, 1], [], []>} : vector<64x128xbf16>, vector<128x128xbf16>, vector<64x128xf32> -> vector<64x128xf32>
    %41 = arith.addf %37, %40 : vector<64x128xf32>
    %c0_30 = arith.constant 0 : index
    %c0_31 = arith.constant 0 : index
    %42 = vector.load %arg7[%c0_30, %c0_31] : memref<1x128xf32, #tpu.memory_space<vmem>>, vector<1x128xf32>
    %43 = vector.broadcast %42 : vector<1x128xf32> to vector<64x128xf32>
    %44 = arith.addf %41, %43 : vector<64x128xf32>
    %cst_32 = arith.constant 0.000000e+00 : f32
    %45 = vector.broadcast %cst_32 : f32 to vector<64x128xf32>
    %46 = arith.maximumf %44, %45 : vector<64x128xf32>
    %c0_33 = arith.constant 0 : index
    %c0_34 = arith.constant 0 : index
    %47 = vector.load %arg10[%c0_33, %c0_34] : memref<1x128xf32, #tpu.memory_space<vmem>>, vector<1x128xf32>
    %48 = vector.broadcast %47 : vector<1x128xf32> to vector<64x128xf32>
    %49 = arith.subf %46, %48 : vector<64x128xf32>
    %c0_35 = arith.constant 0 : index
    %c0_36 = arith.constant 0 : index
    %50 = vector.load %arg11[%c0_35, %c0_36] : memref<1x128xf32, #tpu.memory_space<vmem>>, vector<1x128xf32>
    %cst_37 = arith.constant 9.99999974E-6 : f32
    %51 = vector.broadcast %cst_37 : f32 to vector<1x128xf32>
    %52 = arith.addf %50, %51 : vector<1x128xf32>
    %53 = math.rsqrt %52 : vector<1x128xf32>
    %54 = vector.broadcast %53 : vector<1x128xf32> to vector<64x128xf32>
    %55 = arith.mulf %49, %54 : vector<64x128xf32>
    %c0_38 = arith.constant 0 : index
    %c0_39 = arith.constant 0 : index
    %56 = vector.load %arg8[%c0_38, %c0_39] : memref<1x128xf32, #tpu.memory_space<vmem>>, vector<1x128xf32>
    %57 = vector.broadcast %56 : vector<1x128xf32> to vector<64x128xf32>
    %58 = arith.mulf %55, %57 : vector<64x128xf32>
    %c0_40 = arith.constant 0 : index
    %c0_41 = arith.constant 0 : index
    %59 = vector.load %arg9[%c0_40, %c0_41] : memref<1x128xf32, #tpu.memory_space<vmem>>, vector<1x128xf32>
    %60 = vector.broadcast %59 : vector<1x128xf32> to vector<64x128xf32>
    %61 = arith.addf %58, %60 : vector<64x128xf32>
    %62 = arith.mulf %61, %61 : vector<64x128xf32>
    %cst_42 = arith.constant dense<0.000000e+00> : vector<64xf32>
    %63 = vector.multi_reduction <add>, %62, %cst_42 [1] : vector<64x128xf32> to vector<64xf32>
    %64 = vector.shape_cast %63 : vector<64xf32> to vector<64x1xf32>
    %65 = math.sqrt %64 : vector<64x1xf32>
    %cst_43 = arith.constant 9.99999997E-7 : f32
    %66 = vector.broadcast %cst_43 : f32 to vector<64x1xf32>
    %67 = arith.addf %65, %66 : vector<64x1xf32>
    %68 = tpu.reciprocal %67 {approx = true} : vector<64x1xf32> -> vector<64x1xf32>
    %69 = vector.broadcast %68 : vector<64x1xf32> to vector<64x128xf32>
    %70 = arith.mulf %61, %69 : vector<64x128xf32>
    %c0_44 = arith.constant 0 : index
    %c0_45 = arith.constant 0 : index
    %71 = vector.load %arg12[%c0_44, %c0_45] : memref<64x128xf32, #tpu.memory_space<vmem>>, vector<64x128xf32>
    tpu.vector_store %arg12[%c0_44, %c0_45], %70 {strides = array<i32>} : memref<64x128xf32, #tpu.memory_space<vmem>>, vector<64x128xf32>,
    return
  }
  func.func @transform_0(%arg0: i32) -> (i32, i32) {
    %c0_i32 = arith.constant 0 : i32
    %c0_i32_0 = arith.constant 0 : i32
    %c0_i32_1 = arith.constant 0 : i32
    return %c0_i32, %c0_i32_0 : i32, i32
  }
  func.func @transform_1(%arg0: i32) -> (i32, i32, i32) {
    %c0_i32 = arith.constant 0 : i32
    %c0_i32_0 = arith.constant 0 : i32
    %c0_i32_1 = arith.constant 0 : i32
    return %c0_i32, %arg0, %c0_i32_0 : i32, i32, i32
  }
  func.func @transform_2(%arg0: i32) -> (i32, i32) {
    %c0_i32 = arith.constant 0 : i32
    %c0_i32_0 = arith.constant 0 : i32
    %c0_i32_1 = arith.constant 0 : i32
    return %c0_i32, %c0_i32_0 : i32, i32
  }
  func.func @transform_3(%arg0: i32) -> (i32, i32) {
    %c0_i32 = arith.constant 0 : i32
    %c0_i32_0 = arith.constant 0 : i32
    %c0_i32_1 = arith.constant 0 : i32
    return %c0_i32, %c0_i32_0 : i32, i32
  }
  func.func @transform_4(%arg0: i32) -> (i32, i32) {
    %c0_i32 = arith.constant 0 : i32
    %c0_i32_0 = arith.constant 0 : i32
    %c0_i32_1 = arith.constant 0 : i32
    return %c0_i32, %c0_i32_0 : i32, i32
  }
  func.func @transform_5(%arg0: i32) -> (i32, i32) {
    %c0_i32 = arith.constant 0 : i32
    %c0_i32_0 = arith.constant 0 : i32
    %c0_i32_1 = arith.constant 0 : i32
    return %c0_i32, %c0_i32_0 : i32, i32
  }
  func.func @transform_6(%arg0: i32) -> (i32, i32) {
    %c0_i32 = arith.constant 0 : i32
    %c0_i32_0 = arith.constant 0 : i32
    %c0_i32_1 = arith.constant 0 : i32
    return %c0_i32, %c0_i32_0 : i32, i32
  }
  func.func @transform_7(%arg0: i32) -> (i32, i32) {
    %c0_i32 = arith.constant 0 : i32
    %c0_i32_0 = arith.constant 0 : i32
    %c0_i32_1 = arith.constant 0 : i32
    return %c0_i32, %c0_i32_0 : i32, i32
  }
  func.func @transform_8(%arg0: i32) -> (i32, i32) {
    %c0_i32 = arith.constant 0 : i32
    %c0_i32_0 = arith.constant 0 : i32
    %c0_i32_1 = arith.constant 0 : i32
    return %c0_i32, %c0_i32_0 : i32, i32
  }
  func.func @transform_9(%arg0: i32) -> (i32, i32) {
    %c0_i32 = arith.constant 0 : i32
    %c0_i32_0 = arith.constant 0 : i32
    %c0_i32_1 = arith.constant 0 : i32
    return %c0_i32, %c0_i32_0 : i32, i32
  }
  func.func @transform_10(%arg0: i32) -> (i32, i32) {
    %c0_i32 = arith.constant 0 : i32
    %c0_i32_0 = arith.constant 0 : i32
    %c0_i32_1 = arith.constant 0 : i32
    return %c0_i32, %c0_i32_0 : i32, i32
  }
  func.func @transform_11(%arg0: i32) -> (i32, i32) {
    %c0_i32 = arith.constant 0 : i32
    %c0_i32_0 = arith.constant 0 : i32
    return %arg0, %c0_i32 : i32, i32
  }
}

</mosaic_0001>

<llo_original>
// kernel: graphsage_forward.3
$region0: #{graphsage_forward.3}
  #allocation0 [shape = 'u32[]', space=smem, size = 0x4, offset = 0x4, fixed_abs, tag = 'smem constant byte address 0x4 - core index']
  #allocation1 [shape = 'u32[144,128]{1,0:T(1,128)}', space=vmem, size = 0x12000, scoped, tag = 'internal scratch']
  %s0 = inlined_call_operand.vmem [shape: f32[64,128], index: 0, kind: input, shape index: {}]
  %s1 = inlined_call_operand.vmem [shape: bf16[5,64,64], index: 1, kind: input, shape index: {}]
  %s2 = inlined_call_operand.vmem [shape: bf16[128,128], index: 2, kind: input, shape index: {}]
  %s3 = inlined_call_operand.vmem [shape: f32[1,128], index: 3, kind: input, shape index: {}]
  %s4 = inlined_call_operand.vmem [shape: bf16[128,128], index: 4, kind: input, shape index: {}]
  %s5 = inlined_call_operand.vmem [shape: bf16[128,128], index: 5, kind: input, shape index: {}]
  %s6 = inlined_call_operand.vmem [shape: f32[1,128], index: 6, kind: input, shape index: {}]
  %s7 = inlined_call_operand.hbm [shape: f32[64,128], index: 7, kind: output, shape index: {}]
  %s8 = sld [smem:[#allocation0]]
  $region38: #{graphsage_forward.3} parent=0
    _
  %s10 = ssub.s32 1, %s8
  %s11 = scalar_select 0, %s10, %s8
  $region1: #{graphsage_forward.3} parent=0
    #allocation2 [shape = 'u8[32768]{0}', space=vmem, size = 0x8000, scoped, tag = 'output window, operand 0, single buffered']
    #allocation3 [shape = 's32[1]{0}', space=sflag, size = 0x4, scoped, tag = 'scoped memory for graphsage_forward.3']
    %12 = vsyncpa [#allocation3], 0
    // Predicated region
    $region2: #{graphsage_forward.3} parent=1 // pred_check
      _
    $region3: #{graphsage_forward.3} parent=1 // pred_check_branch
      %14 = sbr.rel (0) target = $region5
    $region4: #{graphsage_forward.3} parent=1 // pred_region
      _
    $region5: #{graphsage_forward.3} parent=1 // pred_fallthru
      _
    // Predicated region
    $region6: #{graphsage_forward.3} parent=1 // pred_check
      _
    $region7: #{graphsage_forward.3} parent=1 // pred_check_branch
      %16 = sbr.rel (0) target = $region9
    $region8: #{graphsage_forward.3} parent=1 // pred_region
      _
    $region9: #{graphsage_forward.3} parent=1 // pred_fallthru
      _
    // Predicated region
    $region10: #{graphsage_forward.3} parent=1 // pred_check
      _
    $region11: #{graphsage_forward.3} parent=1 // pred_check_branch
      %18 = sbr.rel (0) target = $region13
    $region12: #{graphsage_forward.3} parent=1 // pred_region
      _
    $region13: #{graphsage_forward.3} parent=1 // pred_fallthru
      _
    // Predicated region
    $region14: #{graphsage_forward.3} parent=1 // pred_check
      _
    $region15: #{graphsage_forward.3} parent=1 // pred_check_branch
      %20 = sbr.rel (0) target = $region17
    $region16: #{graphsage_forward.3} parent=1 // pred_region
      _
    $region17: #{graphsage_forward.3} parent=1 // pred_fallthru
      _
    // Predicated region
    $region18: #{graphsage_forward.3} parent=1 // pred_check
      _
    $region19: #{graphsage_forward.3} parent=1 // pred_check_branch
      %22 = sbr.rel (0) target = $region21
    $region20: #{graphsage_forward.3} parent=1 // pred_region
      _
    $region21: #{graphsage_forward.3} parent=1 // pred_fallthru
      _
    // Predicated region
    $region22: #{graphsage_forward.3} parent=1 // pred_check
      _
    $region23: #{graphsage_forward.3} parent=1 // pred_check_branch
      %24 = sbr.rel (0) target = $region25
    $region24: #{graphsage_forward.3} parent=1 // pred_region
      _
    $region25: #{graphsage_forward.3} parent=1 // pred_fallthru
      _
    // Predicated region
    $region26: #{graphsage_forward.3} parent=1 // pred_check
      _
    $region27: #{graphsage_forward.3} parent=1 // pred_check_branch
      %26 = sbr.rel (0) target = $region29
    $region28: #{graphsage_forward.3} parent=1 // pred_region
      _
    $region29: #{graphsage_forward.3} parent=1 // pred_fallthru
      _
    %v28 = vld [vmem:[%s0] sm:$0xff]
    %v29 = vld [vmem:[%s0 + $0x8] sm:$0xff]
    %v30 = vld [vmem:[%s0 + $0x10] sm:$0xff]
    %v31 = vld [vmem:[%s0 + $0x18] sm:$0xff]
    %v32 = vld [vmem:[%s0 + $0x20] sm:$0xff]
    %v33 = vld [vmem:[%s0 + $0x28] sm:$0xff]
    %v34 = vld [vmem:[%s0 + $0x30] sm:$0xff]
    %v35 = vld [vmem:[%s0 + $0x38] sm:$0xff]
    %v36 = vpack.c.bf16 %v29, %v28
    %v37 = vpack.c.bf16 %v31, %v30
    %v38 = vpack.c.bf16 %v33, %v32
    %v39 = vpack.c.bf16 %v35, %v34
    %v40 = vld [vmem:[%s2] sm:$0xf]
    %v41 = vld [vmem:[%s2 + $0x4] sm:$0xf]
    %v42 = vld [vmem:[%s2 + $0x8] sm:$0xf]
    %v43 = vld [vmem:[%s2 + $0xc] sm:$0xf]
    %v44 = vld [vmem:[%s2 + $0x10] sm:$0xf]
    %v45 = vld [vmem:[%s2 + $0x14] sm:$0xf]
    %v46 = vld [vmem:[%s2 + $0x18] sm:$0xf]
    %v47 = vld [vmem:[%s2 + $0x1c] sm:$0xf]
    %v48 = vld [vmem:[%s2 + $0x20] sm:$0xf]
    %v49 = vld [vmem:[%s2 + $0x24] sm:$0xf]
    %v50 = vld [vmem:[%s2 + $0x28] sm:$0xf]
    %v51 = vld [vmem:[%s2 + $0x2c] sm:$0xf]
    %v52 = vld [vmem:[%s2 + $0x30] sm:$0xf]
    %v53 = vld [vmem:[%s2 + $0x34] sm:$0xf]
    %v54 = vld [vmem:[%s2 + $0x38] sm:$0xf]
    %v55 = vld [vmem:[%s2 + $0x3c] sm:$0xf]
    %v56 = vld [vmem:[%s3] sm:$0x1]
    %v58 = vlaneseq
    %v59 = vshrl.u32 %v58, 7
    %v60 = vsub.s32 0, %v59
    %v61 = vrot.slane %v56, %v60
    %v79 = vunpack.c.l.b16 %v40
    %v80 = vunpack.c.l.b16 %v41
    %v81 = vunpack.c.l.b16 %v42
    %v82 = vunpack.c.l.b16 %v43
    %v83 = vunpack.c.l.b16 %v44
    %v84 = vunpack.c.l.b16 %v45
    %v85 = vunpack.c.l.b16 %v46
    %v86 = vunpack.c.l.b16 %v47
    %v87 = vunpack.c.l.b16 %v48
    %v88 = vunpack.c.l.b16 %v49
    %v89 = vunpack.c.l.b16 %v50
    %v90 = vunpack.c.l.b16 %v51
    %v91 = vunpack.c.l.b16 %v52
    %v92 = vunpack.c.l.b16 %v53
    %v93 = vunpack.c.l.b16 %v54
    %v94 = vunpack.c.l.b16 %v55
    %v95 = vpack.c.b16 %v80, %v79
    %v96 = vpack.c.b16 %v82, %v81
    %v97 = vpack.c.b16 %v84, %v83
    %v98 = vpack.c.b16 %v86, %v85
    %v99 = vpack.c.b16 %v88, %v87
    %v100 = vpack.c.b16 %v90, %v89
    %v101 = vpack.c.b16 %v92, %v91
    %v102 = vpack.c.b16 %v94, %v93
    %111 = vmatprep.subr.bf16.mxu0 0
    %112 = vmatpush1.bf16.msra.mxu0 %v95
    %113 = vmatprep.subr.bf16.mxu0 0
    %114 = vmatpush1.bf16.msra.mxu0 %v96
    %115 = vmatprep.subr.bf16.mxu0 0
    %116 = vmatpush1.bf16.msra.mxu0 %v97
    %117 = vmatprep.subr.bf16.mxu0 0
    %118 = vmatpush1.bf16.msra.mxu0 %v98
    %119 = vmatprep.subr.bf16.mxu0 0
    %120 = vmatpush1.bf16.msra.mxu0 %v99
    %121 = vmatprep.subr.bf16.mxu0 0
    %122 = vmatpush1.bf16.msra.mxu0 %v100
    %123 = vmatprep.subr.bf16.mxu0 0
    %124 = vmatpush1.bf16.msra.mxu0 %v101
    %125 = vmatprep.subr.bf16.mxu0 0
    %126 = vmatpush1.bf16.msra.mxu0 %v102
    %127 = vmatprep.subr.bf16.mxu0 0
    %128 = vmatpush1.bf16.msra.mxu0 0
    %129 = vmatprep.subr.bf16.mxu0 0
    %130 = vmatpush1.bf16.msra.mxu0 0
    %131 = vmatprep.subr.bf16.mxu0 0
    %132 = vmatpush1.bf16.msra.mxu0 0
    %133 = vmatprep.subr.bf16.mxu0 0
    %134 = vmatpush1.bf16.msra.mxu0 0
    %135 = vmatprep.subr.bf16.mxu0 0
    %136 = vmatpush1.bf16.msra.mxu0 0
    %137 = vmatprep.subr.bf16.mxu0 0
    %138 = vmatpush1.bf16.msra.mxu0 0
    %139 = vmatprep.subr.bf16.mxu0 0
    %140 = vmatpush1.bf16.msra.mxu0 0
    %141 = vmatprep.subr.bf16.mxu0 0
    %142 = vmatpush1.bf16.msra.mxu0 0
    %143 = vmatprep.mubr.bf16.mxu0 0
    %144 = vmatmul.mubr.bf16.gmra.mrb[0].mxu0 %v36
    %v145 = vpop.f32.mrb[0].mxu0
    %v146 = vadd.f32 %v61, %v145
    %v147 = vpop.f32.mrb[0].mxu0
    %v148 = vpop.f32.mrb[0].mxu0
    %v149 = vadd.f32 %v61, %v148
    %v150 = vpop.f32.mrb[0].mxu0
    %151 = vmatprep.mubr.bf16.mxu0 0
    %152 = vmatmul.mubr.bf16.gmra.mrb[0].mxu0 %v37
    %v153 = vpop.f32.mrb[0].mxu0
    %v154 = vadd.f32 %v61, %v153
    %v155 = vpop.f32.mrb[0].mxu0
    %v156 = vpop.f32.mrb[0].mxu0
    %v157 = vadd.f32 %v61, %v156
    %v158 = vpop.f32.mrb[0].mxu0
    %159 = vmatprep.mubr.bf16.mxu0 0
    %160 = vmatmul.mubr.bf16.gmra.mrb[0].mxu0 %v38
    %v161 = vpop.f32.mrb[0].mxu0
    %v162 = vadd.f32 %v61, %v161
    %v163 = vpop.f32.mrb[0].mxu0
    %v164 = vpop.f32.mrb[0].mxu0
    %v165 = vadd.f32 %v61, %v164
    %v166 = vpop.f32.mrb[0].mxu0
    %167 = vmatprep.mubr.bf16.mxu0 0
    %168 = vmatmul.mubr.bf16.gmra.mrb[0].mxu0 %v39
    %v169 = vpop.f32.mrb[0].mxu0
    %v170 = vadd.f32 %v61, %v169
    %v171 = vpop.f32.mrb[0].mxu0
    %v172 = vpop.f32.mrb[0].mxu0
    %v173 = vadd.f32 %v61, %v172
    %v174 = vpop.f32.mrb[0].mxu0
    %175 = vdwg.mxu0
    %v176 = vmax.f32 %v146, 0.0
    %v177 = vmax.f32 %v149, 0.0
    %v178 = vmax.f32 %v154, 0.0
    %v179 = vmax.f32 %v157, 0.0
    %v180 = vmax.f32 %v162, 0.0
    %v181 = vmax.f32 %v165, 0.0
    %v182 = vmax.f32 %v170, 0.0
    %v183 = vmax.f32 %v173, 0.0
    %v184 = vpack.c.bf16 %v177, %v176
    %v185 = vpack.c.bf16 %v179, %v178
    %v186 = vpack.c.bf16 %v181, %v180
    %v187 = vpack.c.bf16 %v183, %v182
    %v188 = vld [vmem:[%s1] sm:$0xf]
    %v189 = vld [vmem:[%s1 + $0x4] sm:$0xf]
    %v190 = vld [vmem:[%s1 + $0x8] sm:$0xf]
    %v191 = vld [vmem:[%s1 + $0xc] sm:$0xf]
    %v192 = vld [vmem:[%s1 + $0x10] sm:$0xf]
    %v193 = vld [vmem:[%s1 + $0x14] sm:$0xf]
    %v194 = vld [vmem:[%s1 + $0x18] sm:$0xf]
    %v195 = vld [vmem:[%s1 + $0x1c] sm:$0xf]
    %v204 = vunpack.c.l.b16 %v188
    %v205 = vunpack.c.l.b16 %v189
    %v206 = vunpack.c.l.b16 %v190
    %v207 = vunpack.c.l.b16 %v191
    %v208 = vunpack.c.l.b16 %v192
    %v209 = vunpack.c.l.b16 %v193
    %v210 = vunpack.c.l.b16 %v194
    %v211 = vunpack.c.l.b16 %v195
    %v212 = vpack.c.b16 %v205, %v204
    %v213 = vpack.c.b16 %v207, %v206
    %v214 = vpack.c.b16 %v209, %v208
    %v215 = vpack.c.b16 %v211, %v210
    %vm216 = vcmask 523264
    %v218 = vsel %vm216, %v212, 0
    %v221 = vsel %vm216, %v213, 0
    %v224 = vsel %vm216, %v214, 0
    %v227 = vsel %vm216, %v215, 0
    %229 = vmatprep.subr.bf16.mxu0 0
    %230 = vmatpush1.bf16.msra.mxu0 %v184
    %231 = vmatprep.subr.bf16.mxu0 0
    %232 = vmatpush1.bf16.msra.mxu0 %v185
    %233 = vmatprep.subr.bf16.mxu0 0
    %234 = vmatpush1.bf16.msra.mxu0 %v186
    %235 = vmatprep.subr.bf16.mxu0 0
    %236 = vmatpush1.bf16.msra.mxu0 %v187
    %237 = vmatprep.subr.bf16.mxu0 0
    %238 = vmatpush1.bf16.msra.mxu0 0
    %239 = vmatprep.subr.bf16.mxu0 0
    %240 = vmatpush1.bf16.msra.mxu0 0
    %241 = vmatprep.subr.bf16.mxu0 0
    %242 = vmatpush1.bf16.msra.mxu0 0
    %243 = vmatprep.subr.bf16.mxu0 0
    %244 = vmatpush1.bf16.msra.mxu0 0
    %245 = vmatprep.subr.bf16.mxu0 0
    %246 = vmatpush1.bf16.msra.mxu0 0
    %247 = vmatprep.subr.bf16.mxu0 0
    %248 = vmatpush1.bf16.msra.mxu0 0
    %249 = vmatprep.subr.bf16.mxu0 0
    %250 = vmatpush1.bf16.msra.mxu0 0
    %251 = vmatprep.subr.bf16.mxu0 0
    %252 = vmatpush1.bf16.msra.mxu0 0
    %253 = vmatprep.subr.bf16.mxu0 0
    %254 = vmatpush1.bf16.msra.mxu0 0
    %255 = vmatprep.subr.bf16.mxu0 0
    %256 = vmatpush1.bf16.msra.mxu0 0
    %257 = vmatprep.subr.bf16.mxu0 0
    %258 = vmatpush1.bf16.msra.mxu0 0
    %259 = vmatprep.subr.bf16.mxu0 0
    %260 = vmatpush1.bf16.msra.mxu0 0
    %261 = vmatprep.mubr.bf16.mxu0 0
    %262 = vmatmul.mubr.bf16.gmra.mrb[0].mxu0 %v218
    %v263 = vpop.f32.mrb[0].mxu0
    %v264 = vadd.f32 0.0, %v263
    %v265 = vpop.f32.mrb[0].mxu0
    %v266 = vpop.f32.mrb[0].mxu0
    %v267 = vadd.f32 0.0, %v266
    %v268 = vpop.f32.mrb[0].mxu0
    %269 = vmatprep.mubr.bf16.mxu0 0
    %270 = vmatmul.mubr.bf16.gmra.mrb[0].mxu0 %v221
    %v271 = vpop.f32.mrb[0].mxu0
    %v272 = vadd.f32 0.0, %v271
    %v273 = vpop.f32.mrb[0].mxu0
    %v274 = vpop.f32.mrb[0].mxu0
    %v275 = vadd.f32 0.0, %v274
    %v276 = vpop.f32.mrb[0].mxu0
    %277 = vmatprep.mubr.bf16.mxu0 0
    %278 = vmatmul.mubr.bf16.gmra.mrb[0].mxu0 %v224
    %v279 = vpop.f32.mrb[0].mxu0
    %v280 = vadd.f32 0.0, %v279
    %v281 = vpop.f32.mrb[0].mxu0
    %v282 = vpop.f32.mrb[0].mxu0
    %v283 = vadd.f32 0.0, %v282
    %v284 = vpop.f32.mrb[0].mxu0
    %285 = vmatprep.mubr.bf16.mxu0 0
    %286 = vmatmul.mubr.bf16.gmra.mrb[0].mxu0 %v227
    %v287 = vpop.f32.mrb[0].mxu0
    %v288 = vadd.f32 0.0, %v287
    %v289 = vpop.f32.mrb[0].mxu0
    %v290 = vpop.f32.mrb[0].mxu0
    %v291 = vadd.f32 0.0, %v290
    %v292 = vpop.f32.mrb[0].mxu0
    %293 = vdwg.mxu0
    %v294 = vmax.f32 %v264, 0.0
    %v295 = vmax.f32 %v267, 0.0
    %v296 = vmax.f32 %v272, 0.0
    %v297 = vmax.f32 %v275, 0.0
    %v298 = vmax.f32 %v280, 0.0
    %v299 = vmax.f32 %v283, 0.0
    %v300 = vmax.f32 %v288, 0.0
    %v301 = vmax.f32 %v291, 0.0
    %s302 = scalar_lea.vmem %s1, 32
    %v303 = vld [vmem:[%s302] sm:$0xf]
    %v304 = vld [vmem:[%s302 + $0x4] sm:$0xf]
    %v305 = vld [vmem:[%s302 + $0x8] sm:$0xf]
    %v306 = vld [vmem:[%s302 + $0xc] sm:$0xf]
    %v307 = vld [vmem:[%s302 + $0x10] sm:$0xf]
    %v308 = vld [vmem:[%s302 + $0x14] sm:$0xf]
    %v309 = vld [vmem:[%s302 + $0x18] sm:$0xf]
    %v310 = vld [vmem:[%s302 + $0x1c] sm:$0xf]
    %v319 = vunpack.c.l.b16 %v303
    %v320 = vunpack.c.l.b16 %v304
    %v321 = vunpack.c.l.b16 %v305
    %v322 = vunpack.c.l.b16 %v306
    %v323 = vunpack.c.l.b16 %v307
    %v324 = vunpack.c.l.b16 %v308
    %v325 = vunpack.c.l.b16 %v309
    %v326 = vunpack.c.l.b16 %v310
    %v327 = vpack.c.b16 %v320, %v319
    %v328 = vpack.c.b16 %v322, %v321
    %v329 = vpack.c.b16 %v324, %v323
    %v330 = vpack.c.b16 %v326, %v325
    %v332 = vsel %vm216, %v327, 0
    %v335 = vsel %vm216, %v328, 0
    %v338 = vsel %vm216, %v329, 0
    %v341 = vsel %vm216, %v330, 0
    %343 = vmatprep.subr.bf16.mxu0 0
    %344 = vmatpush1.bf16.msra.mxu0 %v184
    %345 = vmatprep.subr.bf16.mxu0 0
    %346 = vmatpush1.bf16.msra.mxu0 %v185
    %347 = vmatprep.subr.bf16.mxu0 0
    %348 = vmatpush1.bf16.msra.mxu0 %v186
    %349 = vmatprep.subr.bf16.mxu0 0
    %350 = vmatpush1.bf16.msra.mxu0 %v187
    %351 = vmatprep.subr.bf16.mxu0 0
    %352 = vmatpush1.bf16.msra.mxu0 0
    %353 = vmatprep.subr.bf16.mxu0 0
    %354 = vmatpush1.bf16.msra.mxu0 0
    %355 = vmatprep.subr.bf16.mxu0 0
    %356 = vmatpush1.bf16.msra.mxu0 0
    %357 = vmatprep.subr.bf16.mxu0 0
    %358 = vmatpush1.bf16.msra.mxu0 0
    %359 = vmatprep.subr.bf16.mxu0 0
    %360 = vmatpush1.bf16.msra.mxu0 0
    %361 = vmatprep.subr.bf16.mxu0 0
    %362 = vmatpush1.bf16.msra.mxu0 0
    %363 = vmatprep.subr.bf16.mxu0 0
    %364 = vmatpush1.bf16.msra.mxu0 0
    %365 = vmatprep.subr.bf16.mxu0 0
    %366 = vmatpush1.bf16.msra.mxu0 0
    %367 = vmatprep.subr.bf16.mxu0 0
    %368 = vmatpush1.bf16.msra.mxu0 0
    %369 = vmatprep.subr.bf16.mxu0 0
    %370 = vmatpush1.bf16.msra.mxu0 0
    %371 = vmatprep.subr.bf16.mxu0 0
    %372 = vmatpush1.bf16.msra.mxu0 0
    %373 = vmatprep.subr.bf16.mxu0 0
    %374 = vmatpush1.bf16.msra.mxu0 0
    %375 = vmatprep.mubr.bf16.mxu0 0
    %376 = vmatmul.mubr.bf16.gmra.mrb[0].mxu0 %v332
    %v377 = vpop.f32.mrb[0].mxu0
    %v378 = vadd.f32 0.0, %v377
    %v379 = vpop.f32.mrb[0].mxu0
    %v380 = vpop.f32.mrb[0].mxu0
    %v381 = vadd.f32 0.0, %v380
    %v382 = vpop.f32.mrb[0].mxu0
    %383 = vmatprep.mubr.bf16.mxu0 0
    %384 = vmatmul.mubr.bf16.gmra.mrb[0].mxu0 %v335
    %v385 = vpop.f32.mrb[0].mxu0
    %v386 = vadd.f32 0.0, %v385
    %v387 = vpop.f32.mrb[0].mxu0
    %v388 = vpop.f32.mrb[0].mxu0
    %v389 = vadd.f32 0.0, %v388
    %v390 = vpop.f32.mrb[0].mxu0
    %391 = vmatprep.mubr.bf16.mxu0 0
    %392 = vmatmul.mubr.bf16.gmra.mrb[0].mxu0 %v338
    %v393 = vpop.f32.mrb[0].mxu0
    %v394 = vadd.f32 0.0, %v393
    %v395 = vpop.f32.mrb[0].mxu0
    %v396 = vpop.f32.mrb[0].mxu0
    %v397 = vadd.f32 0.0, %v396
    %v398 = vpop.f32.mrb[0].mxu0
    %399 = vmatprep.mubr.bf16.mxu0 0
    %400 = vmatmul.mubr.bf16.gmra.mrb[0].mxu0 %v341
    %v401 = vpop.f32.mrb[0].mxu0
    %v402 = vadd.f32 0.0, %v401
    %v403 = vpop.f32.mrb[0].mxu0
    %v404 = vpop.f32.mrb[0].mxu0
    %v405 = vadd.f32 0.0, %v404
    %v406 = vpop.f32.mrb[0].mxu0
    %407 = vdwg.mxu0
    %v408 = vmax.f32 %v294, %v378
    %v409 = vmax.f32 %v295, %v381
    %v410 = vmax.f32 %v296, %v386
    %v411 = vmax.f32 %v297, %v389
    %v412 = vmax.f32 %v298, %v394
    %v413 = vmax.f32 %v299, %v397
    %v414 = vmax.f32 %v300, %v402
    %v415 = vmax.f32 %v301, %v405
    %s416 = scalar_lea.vmem %s1, 64
    %v417 = vld [vmem:[%s416] sm:$0xf]
    %v418 = vld [vmem:[%s416 + $0x4] sm:$0xf]
    %v419 = vld [vmem:[%s416 + $0x8] sm:$0xf]
    %v420 = vld [vmem:[%s416 + $0xc] sm:$0xf]
    %v421 = vld [vmem:[%s416 + $0x10] sm:$0xf]
    %v422 = vld [vmem:[%s416 + $0x14] sm:$0xf]
    %v423 = vld [vmem:[%s416 + $0x18] sm:$0xf]
    %v424 = vld [vmem:[%s416 + $0x1c] sm:$0xf]
    %v433 = vunpack.c.l.b16 %v417
    %v434 = vunpack.c.l.b16 %v418
    %v435 = vunpack.c.l.b16 %v419
    %v436 = vunpack.c.l.b16 %v420
    %v437 = vunpack.c.l.b16 %v421
    %v438 = vunpack.c.l.b16 %v422
    %v439 = vunpack.c.l.b16 %v423
    %v440 = vunpack.c.l.b16 %v424
    %v441 = vpack.c.b16 %v434, %v433
    %v442 = vpack.c.b16 %v436, %v435
    %v443 = vpack.c.b16 %v438, %v437
    %v444 = vpack.c.b16 %v440, %v439
    %v446 = vsel %vm216, %v441, 0
    %v449 = vsel %vm216, %v442, 0
    %v452 = vsel %vm216, %v443, 0
    %v455 = vsel %vm216, %v444, 0
    %457 = vmatprep.subr.bf16.mxu0 0
    %458 = vmatpush1.bf16.msra.mxu0 %v184
    %459 = vmatprep.subr.bf16.mxu0 0
    %460 = vmatpush1.bf16.msra.mxu0 %v185
    %461 = vmatprep.subr.bf16.mxu0 0
    %462 = vmatpush1.bf16.msra.mxu0 %v186
    %463 = vmatprep.subr.bf16.mxu0 0
    %464 = vmatpush1.bf16.msra.mxu0 %v187
    %465 = vmatprep.subr.bf16.mxu0 0
    %466 = vmatpush1.bf16.msra.mxu0 0
    %467 = vmatprep.subr.bf16.mxu0 0
    %468 = vmatpush1.bf16.msra.mxu0 0
    %469 = vmatprep.subr.bf16.mxu0 0
    %470 = vmatpush1.bf16.msra.mxu0 0
    %471 = vmatprep.subr.bf16.mxu0 0
    %472 = vmatpush1.bf16.msra.mxu0 0
    %473 = vmatprep.subr.bf16.mxu0 0
    %474 = vmatpush1.bf16.msra.mxu0 0
    %475 = vmatprep.subr.bf16.mxu0 0
    %476 = vmatpush1.bf16.msra.mxu0 0
    %477 = vmatprep.subr.bf16.mxu0 0
    %478 = vmatpush1.bf16.msra.mxu0 0
    %479 = vmatprep.subr.bf16.mxu0 0
    %480 = vmatpush1.bf16.msra.mxu0 0
    %481 = vmatprep.subr.bf16.mxu0 0
    %482 = vmatpush1.bf16.msra.mxu0 0
    %483 = vmatprep.subr.bf16.mxu0 0
    %484 = vmatpush1.bf16.msra.mxu0 0
    %485 = vmatprep.subr.bf16.mxu0 0
    %486 = vmatpush1.bf16.msra.mxu0 0
    %487 = vmatprep.subr.bf16.mxu0 0
    %488 = vmatpush1.bf16.msra.mxu0 0
    %489 = vmatprep.mubr.bf16.mxu0 0
    %490 = vmatmul.mubr.bf16.gmra.mrb[0].mxu0 %v446
    %v491 = vpop.f32.mrb[0].mxu0
    %v492 = vadd.f32 0.0, %v491
    %v493 = vpop.f32.mrb[0].mxu0
    %v494 = vpop.f32.mrb[0].mxu0
    %v495 = vadd.f32 0.0, %v494
    %v496 = vpop.f32.mrb[0].mxu0
    %497 = vmatprep.mubr.bf16.mxu0 0
    %498 = vmatmul.mubr.bf16.gmra.mrb[0].mxu0 %v449
    %v499 = vpop.f32.mrb[0].mxu0
    %v500 = vadd.f32 0.0, %v499
    %v501 = vpop.f32.mrb[0].mxu0
    %v502 = vpop.f32.mrb[0].mxu0
    %v503 = vadd.f32 0.0, %v502
    %v504 = vpop.f32.mrb[0].mxu0
    %505 = vmatprep.mubr.bf16.mxu0 0
    %506 = vmatmul.mubr.bf16.gmra.mrb[0].mxu0 %v452
    %v507 = vpop.f32.mrb[0].mxu0
    %v508 = vadd.f32 0.0, %v507
    %v509 = vpop.f32.mrb[0].mxu0
    %v510 = vpop.f32.mrb[0].mxu0
    %v511 = vadd.f32 0.0, %v510
    %v512 = vpop.f32.mrb[0].mxu0
    %513 = vmatprep.mubr.bf16.mxu0 0
    %514 = vmatmul.mubr.bf16.gmra.mrb[0].mxu0 %v455
    %v515 = vpop.f32.mrb[0].mxu0
    %v516 = vadd.f32 0.0, %v515
    %v517 = vpop.f32.mrb[0].mxu0
    %v518 = vpop.f32.mrb[0].mxu0
    %v519 = vadd.f32 0.0, %v518
    %v520 = vpop.f32.mrb[0].mxu0
    %521 = vdwg.mxu0
    %v522 = vmax.f32 %v408, %v492
    %v523 = vmax.f32 %v409, %v495
    %v524 = vmax.f32 %v410, %v500
    %v525 = vmax.f32 %v411, %v503
    %v526 = vmax.f32 %v412, %v508
    %v527 = vmax.f32 %v413, %v511
    %v528 = vmax.f32 %v414, %v516
    %v529 = vmax.f32 %v415, %v519
    %s530 = scalar_lea.vmem %s1, 96
    %v531 = vld [vmem:[%s530] sm:$0xf]
    %v532 = vld [vmem:[%s530 + $0x4] sm:$0xf]
    %v533 = vld [vmem:[%s530 + $0x8] sm:$0xf]
    %v534 = vld [vmem:[%s530 + $0xc] sm:$0xf]
    %v535 = vld [vmem:[%s530 + $0x10] sm:$0xf]
    %v536 = vld [vmem:[%s530 + $0x14] sm:$0xf]
    %v537 = vld [vmem:[%s530 + $0x18] sm:$0xf]
    %v538 = vld [vmem:[%s530 + $0x1c] sm:$0xf]
    %v547 = vunpack.c.l.b16 %v531
    %v548 = vunpack.c.l.b16 %v532
    %v549 = vunpack.c.l.b16 %v533
    %v550 = vunpack.c.l.b16 %v534
    %v551 = vunpack.c.l.b16 %v535
    %v552 = vunpack.c.l.b16 %v536
    %v553 = vunpack.c.l.b16 %v537
    %v554 = vunpack.c.l.b16 %v538
    %v555 = vpack.c.b16 %v548, %v547
    %v556 = vpack.c.b16 %v550, %v549
    %v557 = vpack.c.b16 %v552, %v551
    %v558 = vpack.c.b16 %v554, %v553
    %v560 = vsel %vm216, %v555, 0
    %v563 = vsel %vm216, %v556, 0
    %v566 = vsel %vm216, %v557, 0
    %v569 = vsel %vm216, %v558, 0
    %571 = vmatprep.subr.bf16.mxu0 0
    %572 = vmatpush1.bf16.msra.mxu0 %v184
    %573 = vmatprep.subr.bf16.mxu0 0
    %574 = vmatpush1.bf16.msra.mxu0 %v185
    %575 = vmatprep.subr.bf16.mxu0 0
    %576 = vmatpush1.bf16.msra.mxu0 %v186
    %577 = vmatprep.subr.bf16.mxu0 0
    %578 = vmatpush1.bf16.msra.mxu0 %v187
    %579 = vmatprep.subr.bf16.mxu0 0
    %580 = vmatpush1.bf16.msra.mxu0 0
    %581 = vmatprep.subr.bf16.mxu0 0
    %582 = vmatpush1.bf16.msra.mxu0 0
    %583 = vmatprep.subr.bf16.mxu0 0
    %584 = vmatpush1.bf16.msra.mxu0 0
    %585 = vmatprep.subr.bf16.mxu0 0
    %586 = vmatpush1.bf16.msra.mxu0 0
    %587 = vmatprep.subr.bf16.mxu0 0
    %588 = vmatpush1.bf16.msra.mxu0 0
    %589 = vmatprep.subr.bf16.mxu0 0
    %590 = vmatpush1.bf16.msra.mxu0 0
    %591 = vmatprep.subr.bf16.mxu0 0
    %592 = vmatpush1.bf16.msra.mxu0 0
    %593 = vmatprep.subr.bf16.mxu0 0
    %594 = vmatpush1.bf16.msra.mxu0 0
    %595 = vmatprep.subr.bf16.mxu0 0
    %596 = vmatpush1.bf16.msra.mxu0 0
    %597 = vmatprep.subr.bf16.mxu0 0
    %598 = vmatpush1.bf16.msra.mxu0 0
    %599 = vmatprep.subr.bf16.mxu0 0
    %600 = vmatpush1.bf16.msra.mxu0 0
    %601 = vmatprep.subr.bf16.mxu0 0
    %602 = vmatpush1.bf16.msra.mxu0 0
    %603 = vmatprep.mubr.bf16.mxu0 0
    %604 = vmatmul.mubr.bf16.gmra.mrb[0].mxu0 %v560
    %v605 = vpop.f32.mrb[0].mxu0
    %v606 = vadd.f32 0.0, %v605
    %v607 = vpop.f32.mrb[0].mxu0
    %v608 = vpop.f32.mrb[0].mxu0
    %v609 = vadd.f32 0.0, %v608
    %v610 = vpop.f32.mrb[0].mxu0
    %611 = vmatprep.mubr.bf16.mxu0 0
    %612 = vmatmul.mubr.bf16.gmra.mrb[0].mxu0 %v563
    %v613 = vpop.f32.mrb[0].mxu0
    %v614 = vadd.f32 0.0, %v613
    %v615 = vpop.f32.mrb[0].mxu0
    %v616 = vpop.f32.mrb[0].mxu0
    %v617 = vadd.f32 0.0, %v616
    %v618 = vpop.f32.mrb[0].mxu0
    %619 = vmatprep.mubr.bf16.mxu0 0
    %620 = vmatmul.mubr.bf16.gmra.mrb[0].mxu0 %v566
    %v621 = vpop.f32.mrb[0].mxu0
    %v622 = vadd.f32 0.0, %v621
    %v623 = vpop.f32.mrb[0].mxu0
    %v624 = vpop.f32.mrb[0].mxu0
    %v625 = vadd.f32 0.0, %v624
    %v626 = vpop.f32.mrb[0].mxu0
    %627 = vmatprep.mubr.bf16.mxu0 0
    %628 = vmatmul.mubr.bf16.gmra.mrb[0].mxu0 %v569
    %v629 = vpop.f32.mrb[0].mxu0
    %v630 = vadd.f32 0.0, %v629
    %v631 = vpop.f32.mrb[0].mxu0
    %v632 = vpop.f32.mrb[0].mxu0
    %v633 = vadd.f32 0.0, %v632
    %v634 = vpop.f32.mrb[0].mxu0
    %635 = vdwg.mxu0
    %v636 = vmax.f32 %v522, %v606
    %v637 = vmax.f32 %v523, %v609
    %v638 = vmax.f32 %v524, %v614
    %v639 = vmax.f32 %v525, %v617
    %v640 = vmax.f32 %v526, %v622
    %v641 = vmax.f32 %v527, %v625
    %v642 = vmax.f32 %v528, %v630
    %v643 = vmax.f32 %v529, %v633
    %s644 = scalar_lea.vmem %s1, 128
    %v645 = vld [vmem:[%s644] sm:$0xf]
    %v646 = vld [vmem:[%s644 + $0x4] sm:$0xf]
    %v647 = vld [vmem:[%s644 + $0x8] sm:$0xf]
    %v648 = vld [vmem:[%s644 + $0xc] sm:$0xf]
    %v649 = vld [vmem:[%s644 + $0x10] sm:$0xf]
    %v650 = vld [vmem:[%s644 + $0x14] sm:$0xf]
    %v651 = vld [vmem:[%s644 + $0x18] sm:$0xf]
    %v652 = vld [vmem:[%s644 + $0x1c] sm:$0xf]
    %v661 = vunpack.c.l.b16 %v645
    %v662 = vunpack.c.l.b16 %v646
    %v663 = vunpack.c.l.b16 %v647
    %v664 = vunpack.c.l.b16 %v648
    %v665 = vunpack.c.l.b16 %v649
    %v666 = vunpack.c.l.b16 %v650
    %v667 = vunpack.c.l.b16 %v651
    %v668 = vunpack.c.l.b16 %v652
    %v669 = vpack.c.b16 %v662, %v661
    %v670 = vpack.c.b16 %v664, %v663
    %v671 = vpack.c.b16 %v666, %v665
    %v672 = vpack.c.b16 %v668, %v667
    %v674 = vsel %vm216, %v669, 0
    %v677 = vsel %vm216, %v670, 0
    %v680 = vsel %vm216, %v671, 0
    %v683 = vsel %vm216, %v672, 0
    %685 = vmatprep.subr.bf16.mxu0 0
    %686 = vmatpush1.bf16.msra.mxu0 %v184
    %687 = vmatprep.subr.bf16.mxu0 0
    %688 = vmatpush1.bf16.msra.mxu0 %v185
    %689 = vmatprep.subr.bf16.mxu0 0
    %690 = vmatpush1.bf16.msra.mxu0 %v186
    %691 = vmatprep.subr.bf16.mxu0 0
    %692 = vmatpush1.bf16.msra.mxu0 %v187
    %693 = vmatprep.subr.bf16.mxu0 0
    %694 = vmatpush1.bf16.msra.mxu0 0
    %695 = vmatprep.subr.bf16.mxu0 0
    %696 = vmatpush1.bf16.msra.mxu0 0
    %697 = vmatprep.subr.bf16.mxu0 0
    %698 = vmatpush1.bf16.msra.mxu0 0
    %699 = vmatprep.subr.bf16.mxu0 0
    %700 = vmatpush1.bf16.msra.mxu0 0
    %701 = vmatprep.subr.bf16.mxu0 0
    %702 = vmatpush1.bf16.msra.mxu0 0
    %703 = vmatprep.subr.bf16.mxu0 0
    %704 = vmatpush1.bf16.msra.mxu0 0
    %705 = vmatprep.subr.bf16.mxu0 0
    %706 = vmatpush1.bf16.msra.mxu0 0
    %707 = vmatprep.subr.bf16.mxu0 0
    %708 = vmatpush1.bf16.msra.mxu0 0
    %709 = vmatprep.subr.bf16.mxu0 0
    %710 = vmatpush1.bf16.msra.mxu0 0
    %711 = vmatprep.subr.bf16.mxu0 0
    %712 = vmatpush1.bf16.msra.mxu0 0
    %713 = vmatprep.subr.bf16.mxu0 0
    %714 = vmatpush1.bf16.msra.mxu0 0
    %715 = vmatprep.subr.bf16.mxu0 0
    %716 = vmatpush1.bf16.msra.mxu0 0
    %717 = vmatprep.mubr.bf16.mxu0 0
    %718 = vmatmul.mubr.bf16.gmra.mrb[0].mxu0 %v674
    %v719 = vpop.f32.mrb[0].mxu0
    %v720 = vadd.f32 0.0, %v719
    %v721 = vpop.f32.mrb[0].mxu0
    %v722 = vpop.f32.mrb[0].mxu0
    %v723 = vadd.f32 0.0, %v722
    %v724 = vpop.f32.mrb[0].mxu0
    %725 = vmatprep.mubr.bf16.mxu0 0
    %726 = vmatmul.mubr.bf16.gmra.mrb[0].mxu0 %v677
    %v727 = vpop.f32.mrb[0].mxu0
    %v728 = vadd.f32 0.0, %v727
    %v729 = vpop.f32.mrb[0].mxu0
    %v730 = vpop.f32.mrb[0].mxu0
    %v731 = vadd.f32 0.0, %v730
    %v732 = vpop.f32.mrb[0].mxu0
    %733 = vmatprep.mubr.bf16.mxu0 0
    %734 = vmatmul.mubr.bf16.gmra.mrb[0].mxu0 %v680
    %v735 = vpop.f32.mrb[0].mxu0
    %v736 = vadd.f32 0.0, %v735
    %v737 = vpop.f32.mrb[0].mxu0
    %v738 = vpop.f32.mrb[0].mxu0
    %v739 = vadd.f32 0.0, %v738
    %v740 = vpop.f32.mrb[0].mxu0
    %741 = vmatprep.mubr.bf16.mxu0 0
    %742 = vmatmul.mubr.bf16.gmra.mrb[0].mxu0 %v683
    %v743 = vpop.f32.mrb[0].mxu0
    %v744 = vadd.f32 0.0, %v743
    %v745 = vpop.f32.mrb[0].mxu0
    %v746 = vpop.f32.mrb[0].mxu0
    %v747 = vadd.f32 0.0, %v746
    %v748 = vpop.f32.mrb[0].mxu0
    %749 = vdwg.mxu0
    %v750 = vmax.f32 %v636, %v720
    %v751 = vmax.f32 %v637, %v723
    %v752 = vmax.f32 %v638, %v728
    %v753 = vmax.f32 %v639, %v731
    %v754 = vmax.f32 %v640, %v736
    %v755 = vmax.f32 %v641, %v739
    %v756 = vmax.f32 %v642, %v744
    %v757 = vmax.f32 %v643, %v747
    %s758 = smul.u32 0, 64
    %s759 = scalar_lea.vmem %s0, %s758
    %v760 = vld [vmem:[%s759] sm:$0xff]
    %v761 = vld [vmem:[%s759 + $0x8] sm:$0xff]
    %v762 = vld [vmem:[%s759 + $0x10] sm:$0xff]
    %v763 = vld [vmem:[%s759 + $0x18] sm:$0xff]
    %v764 = vld [vmem:[%s759 + $0x20] sm:$0xff]
    %v765 = vld [vmem:[%s759 + $0x28] sm:$0xff]
    %v766 = vld [vmem:[%s759 + $0x30] sm:$0xff]
    %v767 = vld [vmem:[%s759 + $0x38] sm:$0xff]
    %v768 = vpack.c.bf16 %v761, %v760
    %v769 = vpack.c.bf16 %v763, %v762
    %v770 = vpack.c.bf16 %v765, %v764
    %v771 = vpack.c.bf16 %v767, %v766
    %v772 = vld [vmem:[%s4] sm:$0xf]
    %v773 = vld [vmem:[%s4 + $0x4] sm:$0xf]
    %v774 = vld [vmem:[%s4 + $0x8] sm:$0xf]
    %v775 = vld [vmem:[%s4 + $0xc] sm:$0xf]
    %v776 = vld [vmem:[%s4 + $0x10] sm:$0xf]
    %v777 = vld [vmem:[%s4 + $0x14] sm:$0xf]
    %v778 = vld [vmem:[%s4 + $0x18] sm:$0xf]
    %v779 = vld [vmem:[%s4 + $0x1c] sm:$0xf]
    %v780 = vld [vmem:[%s4 + $0x20] sm:$0xf]
    %v781 = vld [vmem:[%s4 + $0x24] sm:$0xf]
    %v782 = vld [vmem:[%s4 + $0x28] sm:$0xf]
    %v783 = vld [vmem:[%s4 + $0x2c] sm:$0xf]
    %v784 = vld [vmem:[%s4 + $0x30] sm:$0xf]
    %v785 = vld [vmem:[%s4 + $0x34] sm:$0xf]
    %v786 = vld [vmem:[%s4 + $0x38] sm:$0xf]
    %v787 = vld [vmem:[%s4 + $0x3c] sm:$0xf]
    %v788 = vpack.c.bf16 %v751, %v750
    %v789 = vpack.c.bf16 %v753, %v752
    %v790 = vpack.c.bf16 %v755, %v754
    %v791 = vpack.c.bf16 %v757, %v756
    %v792 = vld [vmem:[%s5] sm:$0xf]
    %v793 = vld [vmem:[%s5 + $0x4] sm:$0xf]
    %v794 = vld [vmem:[%s5 + $0x8] sm:$0xf]
    %v795 = vld [vmem:[%s5 + $0xc] sm:$0xf]
    %v796 = vld [vmem:[%s5 + $0x10] sm:$0xf]
    %v797 = vld [vmem:[%s5 + $0x14] sm:$0xf]
    %v798 = vld [vmem:[%s5 + $0x18] sm:$0xf]
    %v799 = vld [vmem:[%s5 + $0x1c] sm:$0xf]
    %v800 = vld [vmem:[%s5 + $0x20] sm:$0xf]
    %v801 = vld [vmem:[%s5 + $0x24] sm:$0xf]
    %v802 = vld [vmem:[%s5 + $0x28] sm:$0xf]
    %v803 = vld [vmem:[%s5 + $0x2c] sm:$0xf]
    %v804 = vld [vmem:[%s5 + $0x30] sm:$0xf]
    %v805 = vld [vmem:[%s5 + $0x34] sm:$0xf]
    %v806 = vld [vmem:[%s5 + $0x38] sm:$0xf]
    %v807 = vld [vmem:[%s5 + $0x3c] sm:$0xf]
    %v824 = vunpack.c.l.b16 %v792
    %v825 = vunpack.c.l.b16 %v793
    %v826 = vunpack.c.l.b16 %v794
    %v827 = vunpack.c.l.b16 %v795
    %v828 = vunpack.c.l.b16 %v796
    %v829 = vunpack.c.l.b16 %v797
    %v830 = vunpack.c.l.b16 %v798
    %v831 = vunpack.c.l.b16 %v799
    %v832 = vunpack.c.l.b16 %v800
    %v833 = vunpack.c.l.b16 %v801
    %v834 = vunpack.c.l.b16 %v802
    %v835 = vunpack.c.l.b16 %v803
    %v836 = vunpack.c.l.b16 %v804
    %v837 = vunpack.c.l.b16 %v805
    %v838 = vunpack.c.l.b16 %v806
    %v839 = vunpack.c.l.b16 %v807
    %v840 = vpack.c.b16 %v825, %v824
    %v841 = vpack.c.b16 %v827, %v826
    %v842 = vpack.c.b16 %v829, %v828
    %v843 = vpack.c.b16 %v831, %v830
    %v844 = vpack.c.b16 %v833, %v832
    %v845 = vpack.c.b16 %v835, %v834
    %v846 = vpack.c.b16 %v837, %v836
    %v847 = vpack.c.b16 %v839, %v838
    %856 = vmatprep.subr.bf16.mxu0 0
    %857 = vmatpush1.bf16.msra.mxu0 %v840
    %858 = vmatprep.subr.bf16.mxu0 0
    %859 = vmatpush1.bf16.msra.mxu0 %v841
    %860 = vmatprep.subr.bf16.mxu0 0
    %861 = vmatpush1.bf16.msra.mxu0 %v842
    %862 = vmatprep.subr.bf16.mxu0 0
    %863 = vmatpush1.bf16.msra.mxu0 %v843
    %864 = vmatprep.subr.bf16.mxu0 0
    %865 = vmatpush1.bf16.msra.mxu0 %v844
    %866 = vmatprep.subr.bf16.mxu0 0
    %867 = vmatpush1.bf16.msra.mxu0 %v845
    %868 = vmatprep.subr.bf16.mxu0 0
    %869 = vmatpush1.bf16.msra.mxu0 %v846
    %870 = vmatprep.subr.bf16.mxu0 0
    %871 = vmatpush1.bf16.msra.mxu0 %v847
    %872 = vmatprep.subr.bf16.mxu0 0
    %873 = vmatpush1.bf16.msra.mxu0 0
    %874 = vmatprep.subr.bf16.mxu0 0
    %875 = vmatpush1.bf16.msra.mxu0 0
    %876 = vmatprep.subr.bf16.mxu0 0
    %877 = vmatpush1.bf16.msra.mxu0 0
    %878 = vmatprep.subr.bf16.mxu0 0
    %879 = vmatpush1.bf16.msra.mxu0 0
    %880 = vmatprep.subr.bf16.mxu0 0
    %881 = vmatpush1.bf16.msra.mxu0 0
    %882 = vmatprep.subr.bf16.mxu0 0
    %883 = vmatpush1.bf16.msra.mxu0 0
    %884 = vmatprep.subr.bf16.mxu0 0
    %885 = vmatpush1.bf16.msra.mxu0 0
    %886 = vmatprep.subr.bf16.mxu0 0
    %887 = vmatpush1.bf16.msra.mxu0 0
    %888 = vmatprep.mubr.bf16.mxu0 0
    %889 = vmatmul.mubr.bf16.gmra.mrb[0].mxu0 %v788
    %v890 = vpop.f32.mrb[0].mxu0
    %v891 = vadd.f32 0.0, %v890
    %v892 = vpop.f32.mrb[0].mxu0
    %v893 = vpop.f32.mrb[0].mxu0
    %v894 = vadd.f32 0.0, %v893
    %v895 = vpop.f32.mrb[0].mxu0
    %896 = vmatprep.mubr.bf16.mxu0 0
    %897 = vmatmul.mubr.bf16.gmra.mrb[0].mxu0 %v789
    %v898 = vpop.f32.mrb[0].mxu0
    %v899 = vadd.f32 0.0, %v898
    %v900 = vpop.f32.mrb[0].mxu0
    %v901 = vpop.f32.mrb[0].mxu0
    %v902 = vadd.f32 0.0, %v901
    %v903 = vpop.f32.mrb[0].mxu0
    %904 = vmatprep.mubr.bf16.mxu0 0
    %905 = vmatmul.mubr.bf16.gmra.mrb[0].mxu0 %v790
    %v906 = vpop.f32.mrb[0].mxu0
    %v907 = vadd.f32 0.0, %v906
    %v908 = vpop.f32.mrb[0].mxu0
    %v909 = vpop.f32.mrb[0].mxu0
    %v910 = vadd.f32 0.0, %v909
    %v911 = vpop.f32.mrb[0].mxu0
    %912 = vmatprep.mubr.bf16.mxu0 0
    %913 = vmatmul.mubr.bf16.gmra.mrb[0].mxu0 %v791
    %v914 = vpop.f32.mrb[0].mxu0
    %v915 = vadd.f32 0.0, %v914
    %v916 = vpop.f32.mrb[0].mxu0
    %v917 = vpop.f32.mrb[0].mxu0
    %v918 = vadd.f32 0.0, %v917
    %v919 = vpop.f32.mrb[0].mxu0
    %920 = vdwg.mxu0
    %v937 = vunpack.c.l.b16 %v772
    %v938 = vunpack.c.l.b16 %v773
    %v939 = vunpack.c.l.b16 %v774
    %v940 = vunpack.c.l.b16 %v775
    %v941 = vunpack.c.l.b16 %v776
    %v942 = vunpack.c.l.b16 %v777
    %v943 = vunpack.c.l.b16 %v778
    %v944 = vunpack.c.l.b16 %v779
    %v945 = vunpack.c.l.b16 %v780
    %v946 = vunpack.c.l.b16 %v781
    %v947 = vunpack.c.l.b16 %v782
    %v948 = vunpack.c.l.b16 %v783
    %v949 = vunpack.c.l.b16 %v784
    %v950 = vunpack.c.l.b16 %v785
    %v951 = vunpack.c.l.b16 %v786
    %v952 = vunpack.c.l.b16 %v787
    %v953 = vpack.c.b16 %v938, %v937
    %v954 = vpack.c.b16 %v940, %v939
    %v955 = vpack.c.b16 %v942, %v941
    %v956 = vpack.c.b16 %v944, %v943
    %v957 = vpack.c.b16 %v946, %v945
    %v958 = vpack.c.b16 %v948, %v947
    %v959 = vpack.c.b16 %v950, %v949
    %v960 = vpack.c.b16 %v952, %v951
    %969 = vmatprep.subr.bf16.mxu0 0
    %970 = vmatpush1.bf16.msra.mxu0 %v953
    %971 = vmatprep.subr.bf16.mxu0 0
    %972 = vmatpush1.bf16.msra.mxu0 %v954
    %973 = vmatprep.subr.bf16.mxu0 0
    %974 = vmatpush1.bf16.msra.mxu0 %v955
    %975 = vmatprep.subr.bf16.mxu0 0
    %976 = vmatpush1.bf16.msra.mxu0 %v956
    %977 = vmatprep.subr.bf16.mxu0 0
    %978 = vmatpush1.bf16.msra.mxu0 %v957
    %979 = vmatprep.subr.bf16.mxu0 0
    %980 = vmatpush1.bf16.msra.mxu0 %v958
    %981 = vmatprep.subr.bf16.mxu0 0
    %982 = vmatpush1.bf16.msra.mxu0 %v959
    %983 = vmatprep.subr.bf16.mxu0 0
    %984 = vmatpush1.bf16.msra.mxu0 %v960
    %985 = vmatprep.subr.bf16.mxu0 0
    %986 = vmatpush1.bf16.msra.mxu0 0
    %987 = vmatprep.subr.bf16.mxu0 0
    %988 = vmatpush1.bf16.msra.mxu0 0
    %989 = vmatprep.subr.bf16.mxu0 0
    %990 = vmatpush1.bf16.msra.mxu0 0
    %991 = vmatprep.subr.bf16.mxu0 0
    %992 = vmatpush1.bf16.msra.mxu0 0
    %993 = vmatprep.subr.bf16.mxu0 0
    %994 = vmatpush1.bf16.msra.mxu0 0
    %995 = vmatprep.subr.bf16.mxu0 0
    %996 = vmatpush1.bf16.msra.mxu0 0
    %997 = vmatprep.subr.bf16.mxu0 0
    %998 = vmatpush1.bf16.msra.mxu0 0
    %999 = vmatprep.subr.bf16.mxu0 0
    %1000 = vmatpush1.bf16.msra.mxu0 0
    %1001 = vmatprep.mubr.bf16.mxu0 0
    %1002 = vmatmul.mubr.bf16.gmra.mrb[0].mxu0 %v768
    %v1003 = vpop.f32.mrb[0].mxu0
    %v1004 = vadd.f32 %v891, %v1003
    %v1005 = vpop.f32.mrb[0].mxu0
    %v1006 = vpop.f32.mrb[0].mxu0
    %v1007 = vadd.f32 %v894, %v1006
    %v1008 = vpop.f32.mrb[0].mxu0
    %1009 = vmatprep.mubr.bf16.mxu0 0
    %1010 = vmatmul.mubr.bf16.gmra.mrb[0].mxu0 %v769
    %v1011 = vpop.f32.mrb[0].mxu0
    %v1012 = vadd.f32 %v899, %v1011
    %v1013 = vpop.f32.mrb[0].mxu0
    %v1014 = vpop.f32.mrb[0].mxu0
    %v1015 = vadd.f32 %v902, %v1014
    %v1016 = vpop.f32.mrb[0].mxu0
    %1017 = vmatprep.mubr.bf16.mxu0 0
    %1018 = vmatmul.mubr.bf16.gmra.mrb[0].mxu0 %v770
    %v1019 = vpop.f32.mrb[0].mxu0
    %v1020 = vadd.f32 %v907, %v1019
    %v1021 = vpop.f32.mrb[0].mxu0
    %v1022 = vpop.f32.mrb[0].mxu0
    %v1023 = vadd.f32 %v910, %v1022
    %v1024 = vpop.f32.mrb[0].mxu0
    %1025 = vmatprep.mubr.bf16.mxu0 0
    %1026 = vmatmul.mubr.bf16.gmra.mrb[0].mxu0 %v771
    %v1027 = vpop.f32.mrb[0].mxu0
    %v1028 = vadd.f32 %v915, %v1027
    %v1029 = vpop.f32.mrb[0].mxu0
    %v1030 = vpop.f32.mrb[0].mxu0
    %v1031 = vadd.f32 %v918, %v1030
    %v1032 = vpop.f32.mrb[0].mxu0
    %1033 = vdwg.mxu0
    %v1034 = vld [vmem:[%s6] sm:$0x1]
    %v1036 = vlaneseq
    %v1037 = vshrl.u32 %v1036, 7
    %v1038 = vsub.s32 0, %v1037
    %v1039 = vrot.slane %v1034, %v1038
    %v1041 = vadd.f32 %v1004, %v1039
    %v1042 = vadd.f32 %v1007, %v1039
    %v1043 = vadd.f32 %v1012, %v1039
    %v1044 = vadd.f32 %v1015, %v1039
    %v1045 = vadd.f32 %v1020, %v1039
    %v1046 = vadd.f32 %v1023, %v1039
    %v1047 = vadd.f32 %v1028, %v1039
    %v1048 = vadd.f32 %v1031, %v1039
    %1049 = vst [vmem:[#allocation2] sm:$0xff] %v1041
    %1050 = vst [vmem:[#allocation2 + $0x8] sm:$0xff] %v1042
    %1051 = vst [vmem:[#allocation2 + $0x10] sm:$0xff] %v1043
    %1052 = vst [vmem:[#allocation2 + $0x18] sm:$0xff] %v1044
    %1053 = vst [vmem:[#allocation2 + $0x20] sm:$0xff] %v1045
    %1054 = vst [vmem:[#allocation2 + $0x28] sm:$0xff] %v1046
    %1055 = vst [vmem:[#allocation2 + $0x30] sm:$0xff] %v1047
    %1056 = vst [vmem:[#allocation2 + $0x38] sm:$0xff] %v1048
    // Predicated region
    $region30: #{graphsage_forward.3} parent=1 // pred_check
      _
    $region31: #{graphsage_forward.3} parent=1 // pred_check_branch
      %1058 = sbr.rel (0) target = $region33
    $region32: #{graphsage_forward.3} parent=1 // pred_region
      %s1060 = ssub.s32 1024, 1024
      %1061 = vsyncadd [#allocation3], %s1060
      %s1062 = sshll.u32 [#allocation2], 4
      %s1063 = int_to_ptr.vmem [resolvable:$true] %s1062
      %1068 = dma.vmem_to_hbm [thread:$0]  %s1063, 1024, %s7, [#allocation3], 128, 128, 8
    $region33: #{graphsage_forward.3} parent=1 // pred_fallthru
      _
    // Predicated region
    $region34: #{graphsage_forward.3} parent=1 // pred_check
      _
    $region35: #{graphsage_forward.3} parent=1 // pred_check_branch
      %1070 = sbr.rel (0) target = $region37
    $region36: #{graphsage_forward.3} parent=1 // pred_region
      %1071 = dma.done [#allocation3], 1024
    $region37: #{graphsage_forward.3} parent=1 // pred_fallthru
      _
    %1072 = vsyncpa [#allocation3], 1

// kernel: graphsage_forward.2
$region0: #{graphsage_forward.2}
  #allocation0 [shape = 'u32[]', space=smem, size = 0x4, offset = 0x4, fixed_abs, tag = 'smem constant byte address 0x4 - core index']
  #allocation1 [shape = 'u32[144,128]{1,0:T(1,128)}', space=vmem, size = 0x12000, scoped, tag = 'internal scratch']
  %s0 = inlined_call_operand.hbm [shape: f32[64,128], index: 0, kind: input, shape index: {}]
  %s1 = inlined_call_operand.hbm [shape: bf16[5,64,64], index: 1, kind: input, shape index: {}]
  %s2 = inlined_call_operand.hbm [shape: bf16[128,128], index: 2, kind: input, shape index: {}]
  %s3 = inlined_call_operand.vmem [shape: f32[1,128], index: 3, kind: input, shape index: {}]
  %s4 = inlined_call_operand.hbm [shape: bf16[128,128], index: 4, kind: input, shape index: {}]
  %s5 = inlined_call_operand.hbm [shape: bf16[128,128], index: 5, kind: input, shape index: {}]
  %s6 = inlined_call_operand.vmem [shape: f32[1,128], index: 6, kind: input, shape index: {}]
  %s7 = inlined_call_operand.vmem [shape: f32[1,128], index: 7, kind: input, shape index: {}]
  %s8 = inlined_call_operand.vmem [shape: f32[1,128], index: 8, kind: input, shape index: {}]
  %s9 = inlined_call_operand.vmem [shape: f32[1,128], index: 9, kind: input, shape index: {}]
  %s10 = inlined_call_operand.vmem [shape: f32[1,128], index: 10, kind: input, shape index: {}]
  %s11 = inlined_call_operand.vmem [shape: f32[64,128], index: 11, kind: output, shape index: {}]
  %s12 = sld [smem:[#allocation0]]
  $region74: #{graphsage_forward.2} parent=0
    _
  %s14 = ssub.s32 1, %s12
  %s15 = scalar_select 0, %s14, %s12
  $region1: #{graphsage_forward.2} parent=0
    #allocation2 [shape = 'u8[32768]{0}', space=vmem, size = 0x8000, scoped, tag = 'input window, operand 0, single buffered']
    #allocation3 [shape = 's32[1]{0}', space=sflag, size = 0x4, scoped, tag = 'scoped memory for graphsage_forward.2']
    #allocation4 [shape = 'u8[81920]{0}', space=vmem, size = 0x14000, scoped, tag = 'input window, operand 1, single buffered']
    #allocation5 [shape = 's32[1]{0}', space=sflag, size = 0x4, scoped, tag = 'scoped memory for graphsage_forward.2']
    #allocation6 [shape = 'u8[32768]{0}', space=vmem, size = 0x8000, scoped, tag = 'input window, operand 2, single buffered']
    #allocation7 [shape = 'u8[32768]{0}', space=vmem, size = 0x8000, scoped, tag = 'input window, operand 4, single buffered']
    #allocation8 [shape = 's32[1]{0}', space=sflag, size = 0x4, scoped, tag = 'scoped memory for graphsage_forward.2']
    #allocation9 [shape = 'u8[32768]{0}', space=vmem, size = 0x8000, scoped, tag = 'input window, operand 5, single buffered']
    %16 = vsyncpa [#allocation3], 0
    %17 = vsyncpa [#allocation5], 0
    %18 = vsyncpa [#allocation8], 0
    // Predicated region
    $region2: #{graphsage_forward.2} parent=1 // pred_check
      _
    $region3: #{graphsage_forward.2} parent=1 // pred_check_branch
      %20 = sbr.rel (0) target = $region5
    $region4: #{graphsage_forward.2} parent=1 // pred_region
      %s22 = ssub.s32 1024, 1024
      %23 = vsyncadd [#allocation3], %s22
      %s24 = sshll.u32 [#allocation2], 4
      %s25 = int_to_ptr.vmem [resolvable:$true] %s24
      %30 = dma.hbm_to_vmem [thread:$0]  %s0, 1024, %s25, [#allocation3], 128, 128, 8
    $region5: #{graphsage_forward.2} parent=1 // pred_fallthru
      _
    // Predicated region
    $region6: #{graphsage_forward.2} parent=1 // pred_check
      _
    $region7: #{graphsage_forward.2} parent=1 // pred_check_branch
      %32 = sbr.rel (0) target = $region9
    $region8: #{graphsage_forward.2} parent=1 // pred_region
      %s34 = ssub.s32 2560, 2560
      %35 = vsyncadd [#allocation5], %s34
      %s36 = sshll.u32 [#allocation4], 4
      %s37 = int_to_ptr.vmem [resolvable:$true] %s36
      %42 = dma.hbm_to_vmem [thread:$0]  %s1, 2560, %s37, [#allocation5], 64, 64, 4
    $region9: #{graphsage_forward.2} parent=1 // pred_fallthru
      _
    // Predicated region
    $region10: #{graphsage_forward.2} parent=1 // pred_check
      _
    $region11: #{graphsage_forward.2} parent=1 // pred_check_branch
      %44 = sbr.rel (0) target = $region13
    $region12: #{graphsage_forward.2} parent=1 // pred_region
      %s46 = ssub.s32 1024, 1024
      %47 = vsyncadd [#allocation5], %s46
      %s48 = sshll.u32 [#allocation6], 4
      %s49 = int_to_ptr.vmem [resolvable:$true] %s48
      %54 = dma.hbm_to_vmem [thread:$0]  %s2, 1024, %s49, [#allocation5], 64, 64, 4
    $region13: #{graphsage_forward.2} parent=1 // pred_fallthru
      _
    // Predicated region
    $region14: #{graphsage_forward.2} parent=1 // pred_check
      _
    $region15: #{graphsage_forward.2} parent=1 // pred_check_branch
      %56 = sbr.rel (0) target = $region17
    $region16: #{graphsage_forward.2} parent=1 // pred_region
      _
    $region17: #{graphsage_forward.2} parent=1 // pred_fallthru
      _
    // Predicated region
    $region18: #{graphsage_forward.2} parent=1 // pred_check
      _
    $region19: #{graphsage_forward.2} parent=1 // pred_check_branch
      %58 = sbr.rel (0) target = $region21
    $region20: #{graphsage_forward.2} parent=1 // pred_region
      %s60 = ssub.s32 1024, 1024
      %61 = vsyncadd [#allocation8], %s60
      %s62 = sshll.u32 [#allocation7], 4
      %s63 = int_to_ptr.vmem [resolvable:$true] %s62
      %68 = dma.hbm_to_vmem [thread:$0]  %s4, 1024, %s63, [#allocation8], 64, 64, 4
    $region21: #{graphsage_forward.2} parent=1 // pred_fallthru
      _
    // Predicated region
    $region22: #{graphsage_forward.2} parent=1 // pred_check
      _
    $region23: #{graphsage_forward.2} parent=1 // pred_check_branch
      %70 = sbr.rel (0) target = $region25
    $region24: #{graphsage_forward.2} parent=1 // pred_region
      %s72 = ssub.s32 1024, 1024
      %73 = vsyncadd [#allocation8], %s72
      %s74 = sshll.u32 [#allocation9], 4
      %s75 = int_to_ptr.vmem [resolvable:$true] %s74
      %80 = dma.hbm_to_vmem [thread:$0]  %s5, 1024, %s75, [#allocation8], 64, 64, 4
    $region25: #{graphsage_forward.2} parent=1 // pred_fallthru
      _
    // Predicated region
    $region26: #{graphsage_forward.2} parent=1 // pred_check
      _
    $region27: #{graphsage_forward.2} parent=1 // pred_check_branch
      %82 = sbr.rel (0) target = $region29
    $region28: #{graphsage_forward.2} parent=1 // pred_region
      _
    $region29: #{graphsage_forward.2} parent=1 // pred_fallthru
      _
    // Predicated region
    $region30: #{graphsage_forward.2} parent=1 // pred_check
      _
    $region31: #{graphsage_forward.2} parent=1 // pred_check_branch
      %84 = sbr.rel (0) target = $region33
    $region32: #{graphsage_forward.2} parent=1 // pred_region
      _
    $region33: #{graphsage_forward.2} parent=1 // pred_fallthru
      _
    // Predicated region
    $region34: #{graphsage_forward.2} parent=1 // pred_check
      _
    $region35: #{graphsage_forward.2} parent=1 // pred_check_branch
      %86 = sbr.rel (0) target = $region37
    $region36: #{graphsage_forward.2} parent=1 // pred_region
      _
    $region37: #{graphsage_forward.2} parent=1 // pred_fallthru
      _
    // Predicated region
    $region38: #{graphsage_forward.2} parent=1 // pred_check
      _
    $region39: #{graphsage_forward.2} parent=1 // pred_check_branch
      %88 = sbr.rel (0) target = $region41
    $region40: #{graphsage_forward.2} parent=1 // pred_region
      _
    $region41: #{graphsage_forward.2} parent=1 // pred_fallthru
      _
    // Predicated region
    $region42: #{graphsage_forward.2} parent=1 // pred_check
      _
    $region43: #{graphsage_forward.2} parent=1 // pred_check_branch
      %90 = sbr.rel (0) target = $region45
    $region44: #{graphsage_forward.2} parent=1 // pred_region
      _
    $region45: #{graphsage_forward.2} parent=1 // pred_fallthru
      _
    // Predicated region
    $region46: #{graphsage_forward.2} parent=1 // pred_check
      _
    $region47: #{graphsage_forward.2} parent=1 // pred_check_branch
      %92 = sbr.rel (0) target = $region49
    $region48: #{graphsage_forward.2} parent=1 // pred_region
      %93 = dma.done [#allocation3], 1024
    $region49: #{graphsage_forward.2} parent=1 // pred_fallthru
      _
    // Predicated region
    $region50: #{graphsage_forward.2} parent=1 // pred_check
      _
    $region51: #{graphsage_forward.2} parent=1 // pred_check_branch
      %95 = sbr.rel (0) target = $region53
    $region52: #{graphsage_forward.2} parent=1 // pred_region
      %96 = dma.done [#allocation5], 2560
    $region53: #{graphsage_forward.2} parent=1 // pred_fallthru
      _
    // Predicated region
    $region54: #{graphsage_forward.2} parent=1 // pred_check
      _
    $region55: #{graphsage_forward.2} parent=1 // pred_check_branch
      %98 = sbr.rel (0) target = $region57
    $region56: #{graphsage_forward.2} parent=1 // pred_region
      %99 = dma.done [#allocation5], 1024
    $region57: #{graphsage_forward.2} parent=1 // pred_fallthru
      _
    // Predicated region
    $region58: #{graphsage_forward.2} parent=1 // pred_check
      _
    $region59: #{graphsage_forward.2} parent=1 // pred_check_branch
      %101 = sbr.rel (0) target = $region61
    $region60: #{graphsage_forward.2} parent=1 // pred_region
      %102 = dma.done [#allocation8], 1024
    $region61: #{graphsage_forward.2} parent=1 // pred_fallthru
      _
    // Predicated region
    $region62: #{graphsage_forward.2} parent=1 // pred_check
      _
    $region63: #{graphsage_forward.2} parent=1 // pred_check_branch
      %104 = sbr.rel (0) target = $region65
    $region64: #{graphsage_forward.2} parent=1 // pred_region
      %105 = dma.done [#allocation8], 1024
    $region65: #{graphsage_forward.2} parent=1 // pred_fallthru
      _
    %v107 = vld [vmem:[#allocation2] sm:$0xff]
    %v108 = vld [vmem:[#allocation2 + $0x8] sm:$0xff]
    %v109 = vld [vmem:[#allocation2 + $0x10] sm:$0xff]
    %v110 = vld [vmem:[#allocation2 + $0x18] sm:$0xff]
    %v111 = vld [vmem:[#allocation2 + $0x20] sm:$0xff]
    %v112 = vld [vmem:[#allocation2 + $0x28] sm:$0xff]
    %v113 = vld [vmem:[#allocation2 + $0x30] sm:$0xff]
    %v114 = vld [vmem:[#allocation2 + $0x38] sm:$0xff]
    %v115 = vpack.c.bf16 %v108, %v107
    %v116 = vpack.c.bf16 %v110, %v109
    %v117 = vpack.c.bf16 %v112, %v111
    %v118 = vpack.c.bf16 %v114, %v113
    %v119 = vld [vmem:[#allocation6] sm:$0xf]
    %v120 = vld [vmem:[#allocation6 + $0x4] sm:$0xf]
    %v121 = vld [vmem:[#allocation6 + $0x8] sm:$0xf]
    %v122 = vld [vmem:[#allocation6 + $0xc] sm:$0xf]
    %v123 = vld [vmem:[#allocation6 + $0x10] sm:$0xf]
    %v124 = vld [vmem:[#allocation6 + $0x14] sm:$0xf]
    %v125 = vld [vmem:[#allocation6 + $0x18] sm:$0xf]
    %v126 = vld [vmem:[#allocation6 + $0x1c] sm:$0xf]
    %v127 = vld [vmem:[#allocation6 + $0x20] sm:$0xf]
    %v128 = vld [vmem:[#allocation6 + $0x24] sm:$0xf]
    %v129 = vld [vmem:[#allocation6 + $0x28] sm:$0xf]
    %v130 = vld [vmem:[#allocation6 + $0x2c] sm:$0xf]
    %v131 = vld [vmem:[#allocation6 + $0x30] sm:$0xf]
    %v132 = vld [vmem:[#allocation6 + $0x34] sm:$0xf]
    %v133 = vld [vmem:[#allocation6 + $0x38] sm:$0xf]
    %v134 = vld [vmem:[#allocation6 + $0x3c] sm:$0xf]
    %v135 = vld [vmem:[%s3] sm:$0x1]
    %v137 = vlaneseq
    %v138 = vshrl.u32 %v137, 7
    %v139 = vsub.s32 0, %v138
    %v140 = vrot.slane %v135, %v139
    %v158 = vunpack.c.l.b16 %v119
    %v159 = vunpack.c.l.b16 %v120
    %v160 = vunpack.c.l.b16 %v121
    %v161 = vunpack.c.l.b16 %v122
    %v162 = vunpack.c.l.b16 %v123
    %v163 = vunpack.c.l.b16 %v124
    %v164 = vunpack.c.l.b16 %v125
    %v165 = vunpack.c.l.b16 %v126
    %v166 = vunpack.c.l.b16 %v127
    %v167 = vunpack.c.l.b16 %v128
    %v168 = vunpack.c.l.b16 %v129
    %v169 = vunpack.c.l.b16 %v130
    %v170 = vunpack.c.l.b16 %v131
    %v171 = vunpack.c.l.b16 %v132
    %v172 = vunpack.c.l.b16 %v133
    %v173 = vunpack.c.l.b16 %v134
    %v174 = vpack.c.b16 %v159, %v158
    %v175 = vpack.c.b16 %v161, %v160
    %v176 = vpack.c.b16 %v163, %v162
    %v177 = vpack.c.b16 %v165, %v164
    %v178 = vpack.c.b16 %v167, %v166
    %v179 = vpack.c.b16 %v169, %v168
    %v180 = vpack.c.b16 %v171, %v170
    %v181 = vpack.c.b16 %v173, %v172
    %190 = vmatprep.subr.bf16.mxu0 0
    %191 = vmatpush1.bf16.msra.mxu0 %v174
    %192 = vmatprep.subr.bf16.mxu0 0
    %193 = vmatpush1.bf16.msra.mxu0 %v175
    %194 = vmatprep.subr.bf16.mxu0 0
    %195 = vmatpush1.bf16.msra.mxu0 %v176
    %196 = vmatprep.subr.bf16.mxu0 0
    %197 = vmatpush1.bf16.msra.mxu0 %v177
    %198 = vmatprep.subr.bf16.mxu0 0
    %199 = vmatpush1.bf16.msra.mxu0 %v178
    %200 = vmatprep.subr.bf16.mxu0 0
    %201 = vmatpush1.bf16.msra.mxu0 %v179
    %202 = vmatprep.subr.bf16.mxu0 0
    %203 = vmatpush1.bf16.msra.mxu0 %v180
    %204 = vmatprep.subr.bf16.mxu0 0
    %205 = vmatpush1.bf16.msra.mxu0 %v181
    %206 = vmatprep.subr.bf16.mxu0 0
    %207 = vmatpush1.bf16.msra.mxu0 0
    %208 = vmatprep.subr.bf16.mxu0 0
    %209 = vmatpush1.bf16.msra.mxu0 0
    %210 = vmatprep.subr.bf16.mxu0 0
    %211 = vmatpush1.bf16.msra.mxu0 0
    %212 = vmatprep.subr.bf16.mxu0 0
    %213 = vmatpush1.bf16.msra.mxu0 0
    %214 = vmatprep.subr.bf16.mxu0 0
    %215 = vmatpush1.bf16.msra.mxu0 0
    %216 = vmatprep.subr.bf16.mxu0 0
    %217 = vmatpush1.bf16.msra.mxu0 0
    %218 = vmatprep.subr.bf16.mxu0 0
    %219 = vmatpush1.bf16.msra.mxu0 0
    %220 = vmatprep.subr.bf16.mxu0 0
    %221 = vmatpush1.bf16.msra.mxu0 0
    %222 = vmatprep.mubr.bf16.mxu0 0
    %223 = vmatmul.mubr.bf16.gmra.mrb[0].mxu0 %v115
    %v224 = vpop.f32.mrb[0].mxu0
    %v225 = vadd.f32 %v140, %v224
    %v226 = vpop.f32.mrb[0].mxu0
    %v227 = vpop.f32.mrb[0].mxu0
    %v228 = vadd.f32 %v140, %v227
    %v229 = vpop.f32.mrb[0].mxu0
    %230 = vmatprep.mubr.bf16.mxu0 0
    %231 = vmatmul.mubr.bf16.gmra.mrb[0].mxu0 %v116
    %v232 = vpop.f32.mrb[0].mxu0
    %v233 = vadd.f32 %v140, %v232
    %v234 = vpop.f32.mrb[0].mxu0
    %v235 = vpop.f32.mrb[0].mxu0
    %v236 = vadd.f32 %v140, %v235
    %v237 = vpop.f32.mrb[0].mxu0
    %238 = vmatprep.mubr.bf16.mxu0 0
    %239 = vmatmul.mubr.bf16.gmra.mrb[0].mxu0 %v117
    %v240 = vpop.f32.mrb[0].mxu0
    %v241 = vadd.f32 %v140, %v240
    %v242 = vpop.f32.mrb[0].mxu0
    %v243 = vpop.f32.mrb[0].mxu0
    %v244 = vadd.f32 %v140, %v243
    %v245 = vpop.f32.mrb[0].mxu0
    %246 = vmatprep.mubr.bf16.mxu0 0
    %247 = vmatmul.mubr.bf16.gmra.mrb[0].mxu0 %v118
    %v248 = vpop.f32.mrb[0].mxu0
    %v249 = vadd.f32 %v140, %v248
    %v250 = vpop.f32.mrb[0].mxu0
    %v251 = vpop.f32.mrb[0].mxu0
    %v252 = vadd.f32 %v140, %v251
    %v253 = vpop.f32.mrb[0].mxu0
    %254 = vdwg.mxu0
    %v255 = vmax.f32 %v225, 0.0
    %v256 = vmax.f32 %v228, 0.0
    %v257 = vmax.f32 %v233, 0.0
    %v258 = vmax.f32 %v236, 0.0
    %v259 = vmax.f32 %v241, 0.0
    %v260 = vmax.f32 %v244, 0.0
    %v261 = vmax.f32 %v249, 0.0
    %v262 = vmax.f32 %v252, 0.0
    %v263 = vpack.c.bf16 %v256, %v255
    %v264 = vpack.c.bf16 %v258, %v257
    %v265 = vpack.c.bf16 %v260, %v259
    %v266 = vpack.c.bf16 %v262, %v261
    %v267 = vld [vmem:[#allocation4] sm:$0xf]
    %v268 = vld [vmem:[#allocation4 + $0x4] sm:$0xf]
    %v269 = vld [vmem:[#allocation4 + $0x8] sm:$0xf]
    %v270 = vld [vmem:[#allocation4 + $0xc] sm:$0xf]
    %v271 = vld [vmem:[#allocation4 + $0x10] sm:$0xf]
    %v272 = vld [vmem:[#allocation4 + $0x14] sm:$0xf]
    %v273 = vld [vmem:[#allocation4 + $0x18] sm:$0xf]
    %v274 = vld [vmem:[#allocation4 + $0x1c] sm:$0xf]
    %v283 = vunpack.c.l.b16 %v267
    %v284 = vunpack.c.l.b16 %v268
    %v285 = vunpack.c.l.b16 %v269
    %v286 = vunpack.c.l.b16 %v270
    %v287 = vunpack.c.l.b16 %v271
    %v288 = vunpack.c.l.b16 %v272
    %v289 = vunpack.c.l.b16 %v273
    %v290 = vunpack.c.l.b16 %v274
    %v291 = vpack.c.b16 %v284, %v283
    %v292 = vpack.c.b16 %v286, %v285
    %v293 = vpack.c.b16 %v288, %v287
    %v294 = vpack.c.b16 %v290, %v289
    %vm295 = vcmask 523264
    %v297 = vsel %vm295, %v291, 0
    %v300 = vsel %vm295, %v292, 0
    %v303 = vsel %vm295, %v293, 0
    %v306 = vsel %vm295, %v294, 0
    %308 = vmatprep.subr.bf16.mxu0 0
    %309 = vmatpush1.bf16.msra.mxu0 %v263
    %310 = vmatprep.subr.bf16.mxu0 0
    %311 = vmatpush1.bf16.msra.mxu0 %v264
    %312 = vmatprep.subr.bf16.mxu0 0
    %313 = vmatpush1.bf16.msra.mxu0 %v265
    %314 = vmatprep.subr.bf16.mxu0 0
    %315 = vmatpush1.bf16.msra.mxu0 %v266
    %316 = vmatprep.subr.bf16.mxu0 0
    %317 = vmatpush1.bf16.msra.mxu0 0
    %318 = vmatprep.subr.bf16.mxu0 0
    %319 = vmatpush1.bf16.msra.mxu0 0
    %320 = vmatprep.subr.bf16.mxu0 0
    %321 = vmatpush1.bf16.msra.mxu0 0
    %322 = vmatprep.subr.bf16.mxu0 0
    %323 = vmatpush1.bf16.msra.mxu0 0
    %324 = vmatprep.subr.bf16.mxu0 0
    %325 = vmatpush1.bf16.msra.mxu0 0
    %326 = vmatprep.subr.bf16.mxu0 0
    %327 = vmatpush1.bf16.msra.mxu0 0
    %328 = vmatprep.subr.bf16.mxu0 0
    %329 = vmatpush1.bf16.msra.mxu0 0
    %330 = vmatprep.subr.bf16.mxu0 0
    %331 = vmatpush1.bf16.msra.mxu0 0
    %332 = vmatprep.subr.bf16.mxu0 0
    %333 = vmatpush1.bf16.msra.mxu0 0
    %334 = vmatprep.subr.bf16.mxu0 0
    %335 = vmatpush1.bf16.msra.mxu0 0
    %336 = vmatprep.subr.bf16.mxu0 0
    %337 = vmatpush1.bf16.msra.mxu0 0
    %338 = vmatprep.subr.bf16.mxu0 0
    %339 = vmatpush1.bf16.msra.mxu0 0
    %340 = vmatprep.mubr.bf16.mxu0 0
    %341 = vmatmul.mubr.bf16.gmra.mrb[0].mxu0 %v297
    %v342 = vpop.f32.mrb[0].mxu0
    %v343 = vadd.f32 0.0, %v342
    %v344 = vpop.f32.mrb[0].mxu0
    %v345 = vpop.f32.mrb[0].mxu0
    %v346 = vadd.f32 0.0, %v345
    %v347 = vpop.f32.mrb[0].mxu0
    %348 = vmatprep.mubr.bf16.mxu0 0
    %349 = vmatmul.mubr.bf16.gmra.mrb[0].mxu0 %v300
    %v350 = vpop.f32.mrb[0].mxu0
    %v351 = vadd.f32 0.0, %v350
    %v352 = vpop.f32.mrb[0].mxu0
    %v353 = vpop.f32.mrb[0].mxu0
    %v354 = vadd.f32 0.0, %v353
    %v355 = vpop.f32.mrb[0].mxu0
    %356 = vmatprep.mubr.bf16.mxu0 0
    %357 = vmatmul.mubr.bf16.gmra.mrb[0].mxu0 %v303
    %v358 = vpop.f32.mrb[0].mxu0
    %v359 = vadd.f32 0.0, %v358
    %v360 = vpop.f32.mrb[0].mxu0
    %v361 = vpop.f32.mrb[0].mxu0
    %v362 = vadd.f32 0.0, %v361
    %v363 = vpop.f32.mrb[0].mxu0
    %364 = vmatprep.mubr.bf16.mxu0 0
    %365 = vmatmul.mubr.bf16.gmra.mrb[0].mxu0 %v306
    %v366 = vpop.f32.mrb[0].mxu0
    %v367 = vadd.f32 0.0, %v366
    %v368 = vpop.f32.mrb[0].mxu0
    %v369 = vpop.f32.mrb[0].mxu0
    %v370 = vadd.f32 0.0, %v369
    %v371 = vpop.f32.mrb[0].mxu0
    %372 = vdwg.mxu0
    %v373 = vmax.f32 %v343, 0.0
    %v374 = vmax.f32 %v346, 0.0
    %v375 = vmax.f32 %v351, 0.0
    %v376 = vmax.f32 %v354, 0.0
    %v377 = vmax.f32 %v359, 0.0
    %v378 = vmax.f32 %v362, 0.0
    %v379 = vmax.f32 %v367, 0.0
    %v380 = vmax.f32 %v370, 0.0
    %s381 = scalar_lea.vmem [#allocation4], 32
    %v382 = vld [vmem:[%s381] sm:$0xf]
    %v383 = vld [vmem:[%s381 + $0x4] sm:$0xf]
    %v384 = vld [vmem:[%s381 + $0x8] sm:$0xf]
    %v385 = vld [vmem:[%s381 + $0xc] sm:$0xf]
    %v386 = vld [vmem:[%s381 + $0x10] sm:$0xf]
    %v387 = vld [vmem:[%s381 + $0x14] sm:$0xf]
    %v388 = vld [vmem:[%s381 + $0x18] sm:$0xf]
    %v389 = vld [vmem:[%s381 + $0x1c] sm:$0xf]
    %v398 = vunpack.c.l.b16 %v382
    %v399 = vunpack.c.l.b16 %v383
    %v400 = vunpack.c.l.b16 %v384
    %v401 = vunpack.c.l.b16 %v385
    %v402 = vunpack.c.l.b16 %v386
    %v403 = vunpack.c.l.b16 %v387
    %v404 = vunpack.c.l.b16 %v388
    %v405 = vunpack.c.l.b16 %v389
    %v406 = vpack.c.b16 %v399, %v398
    %v407 = vpack.c.b16 %v401, %v400
    %v408 = vpack.c.b16 %v403, %v402
    %v409 = vpack.c.b16 %v405, %v404
    %v411 = vsel %vm295, %v406, 0
    %v414 = vsel %vm295, %v407, 0
    %v417 = vsel %vm295, %v408, 0
    %v420 = vsel %vm295, %v409, 0
    %422 = vmatprep.subr.bf16.mxu0 0
    %423 = vmatpush1.bf16.msra.mxu0 %v263
    %424 = vmatprep.subr.bf16.mxu0 0
    %425 = vmatpush1.bf16.msra.mxu0 %v264
    %426 = vmatprep.subr.bf16.mxu0 0
    %427 = vmatpush1.bf16.msra.mxu0 %v265
    %428 = vmatprep.subr.bf16.mxu0 0
    %429 = vmatpush1.bf16.msra.mxu0 %v266
    %430 = vmatprep.subr.bf16.mxu0 0
    %431 = vmatpush1.bf16.msra.mxu0 0
    %432 = vmatprep.subr.bf16.mxu0 0
    %433 = vmatpush1.bf16.msra.mxu0 0
    %434 = vmatprep.subr.bf16.mxu0 0
    %435 = vmatpush1.bf16.msra.mxu0 0
    %436 = vmatprep.subr.bf16.mxu0 0
    %437 = vmatpush1.bf16.msra.mxu0 0
    %438 = vmatprep.subr.bf16.mxu0 0
    %439 = vmatpush1.bf16.msra.mxu0 0
    %440 = vmatprep.subr.bf16.mxu0 0
    %441 = vmatpush1.bf16.msra.mxu0 0
    %442 = vmatprep.subr.bf16.mxu0 0
    %443 = vmatpush1.bf16.msra.mxu0 0
    %444 = vmatprep.subr.bf16.mxu0 0
    %445 = vmatpush1.bf16.msra.mxu0 0
    %446 = vmatprep.subr.bf16.mxu0 0
    %447 = vmatpush1.bf16.msra.mxu0 0
    %448 = vmatprep.subr.bf16.mxu0 0
    %449 = vmatpush1.bf16.msra.mxu0 0
    %450 = vmatprep.subr.bf16.mxu0 0
    %451 = vmatpush1.bf16.msra.mxu0 0
    %452 = vmatprep.subr.bf16.mxu0 0
    %453 = vmatpush1.bf16.msra.mxu0 0
    %454 = vmatprep.mubr.bf16.mxu0 0
    %455 = vmatmul.mubr.bf16.gmra.mrb[0].mxu0 %v411
    %v456 = vpop.f32.mrb[0].mxu0
    %v457 = vadd.f32 0.0, %v456
    %v458 = vpop.f32.mrb[0].mxu0
    %v459 = vpop.f32.mrb[0].mxu0
    %v460 = vadd.f32 0.0, %v459
    %v461 = vpop.f32.mrb[0].mxu0
    %462 = vmatprep.mubr.bf16.mxu0 0
    %463 = vmatmul.mubr.bf16.gmra.mrb[0].mxu0 %v414
    %v464 = vpop.f32.mrb[0].mxu0
    %v465 = vadd.f32 0.0, %v464
    %v466 = vpop.f32.mrb[0].mxu0
    %v467 = vpop.f32.mrb[0].mxu0
    %v468 = vadd.f32 0.0, %v467
    %v469 = vpop.f32.mrb[0].mxu0
    %470 = vmatprep.mubr.bf16.mxu0 0
    %471 = vmatmul.mubr.bf16.gmra.mrb[0].mxu0 %v417
    %v472 = vpop.f32.mrb[0].mxu0
    %v473 = vadd.f32 0.0, %v472
    %v474 = vpop.f32.mrb[0].mxu0
    %v475 = vpop.f32.mrb[0].mxu0
    %v476 = vadd.f32 0.0, %v475
    %v477 = vpop.f32.mrb[0].mxu0
    %478 = vmatprep.mubr.bf16.mxu0 0
    %479 = vmatmul.mubr.bf16.gmra.mrb[0].mxu0 %v420
    %v480 = vpop.f32.mrb[0].mxu0
    %v481 = vadd.f32 0.0, %v480
    %v482 = vpop.f32.mrb[0].mxu0
    %v483 = vpop.f32.mrb[0].mxu0
    %v484 = vadd.f32 0.0, %v483
    %v485 = vpop.f32.mrb[0].mxu0
    %486 = vdwg.mxu0
    %v487 = vmax.f32 %v373, %v457
    %v488 = vmax.f32 %v374, %v460
    %v489 = vmax.f32 %v375, %v465
    %v490 = vmax.f32 %v376, %v468
    %v491 = vmax.f32 %v377, %v473
    %v492 = vmax.f32 %v378, %v476
    %v493 = vmax.f32 %v379, %v481
    %v494 = vmax.f32 %v380, %v484
    %s495 = scalar_lea.vmem [#allocation4], 64
    %v496 = vld [vmem:[%s495] sm:$0xf]
    %v497 = vld [vmem:[%s495 + $0x4] sm:$0xf]
    %v498 = vld [vmem:[%s495 + $0x8] sm:$0xf]
    %v499 = vld [vmem:[%s495 + $0xc] sm:$0xf]
    %v500 = vld [vmem:[%s495 + $0x10] sm:$0xf]
    %v501 = vld [vmem:[%s495 + $0x14] sm:$0xf]
    %v502 = vld [vmem:[%s495 + $0x18] sm:$0xf]
    %v503 = vld [vmem:[%s495 + $0x1c] sm:$0xf]
    %v512 = vunpack.c.l.b16 %v496
    %v513 = vunpack.c.l.b16 %v497
    %v514 = vunpack.c.l.b16 %v498
    %v515 = vunpack.c.l.b16 %v499
    %v516 = vunpack.c.l.b16 %v500
    %v517 = vunpack.c.l.b16 %v501
    %v518 = vunpack.c.l.b16 %v502
    %v519 = vunpack.c.l.b16 %v503
    %v520 = vpack.c.b16 %v513, %v512
    %v521 = vpack.c.b16 %v515, %v514
    %v522 = vpack.c.b16 %v517, %v516
    %v523 = vpack.c.b16 %v519, %v518
    %v525 = vsel %vm295, %v520, 0
    %v528 = vsel %vm295, %v521, 0
    %v531 = vsel %vm295, %v522, 0
    %v534 = vsel %vm295, %v523, 0
    %536 = vmatprep.subr.bf16.mxu0 0
    %537 = vmatpush1.bf16.msra.mxu0 %v263
    %538 = vmatprep.subr.bf16.mxu0 0
    %539 = vmatpush1.bf16.msra.mxu0 %v264
    %540 = vmatprep.subr.bf16.mxu0 0
    %541 = vmatpush1.bf16.msra.mxu0 %v265
    %542 = vmatprep.subr.bf16.mxu0 0
    %543 = vmatpush1.bf16.msra.mxu0 %v266
    %544 = vmatprep.subr.bf16.mxu0 0
    %545 = vmatpush1.bf16.msra.mxu0 0
    %546 = vmatprep.subr.bf16.mxu0 0
    %547 = vmatpush1.bf16.msra.mxu0 0
    %548 = vmatprep.subr.bf16.mxu0 0
    %549 = vmatpush1.bf16.msra.mxu0 0
    %550 = vmatprep.subr.bf16.mxu0 0
    %551 = vmatpush1.bf16.msra.mxu0 0
    %552 = vmatprep.subr.bf16.mxu0 0
    %553 = vmatpush1.bf16.msra.mxu0 0
    %554 = vmatprep.subr.bf16.mxu0 0
    %555 = vmatpush1.bf16.msra.mxu0 0
    %556 = vmatprep.subr.bf16.mxu0 0
    %557 = vmatpush1.bf16.msra.mxu0 0
    %558 = vmatprep.subr.bf16.mxu0 0
    %559 = vmatpush1.bf16.msra.mxu0 0
    %560 = vmatprep.subr.bf16.mxu0 0
    %561 = vmatpush1.bf16.msra.mxu0 0
    %562 = vmatprep.subr.bf16.mxu0 0
    %563 = vmatpush1.bf16.msra.mxu0 0
    %564 = vmatprep.subr.bf16.mxu0 0
    %565 = vmatpush1.bf16.msra.mxu0 0
    %566 = vmatprep.subr.bf16.mxu0 0
    %567 = vmatpush1.bf16.msra.mxu0 0
    %568 = vmatprep.mubr.bf16.mxu0 0
    %569 = vmatmul.mubr.bf16.gmra.mrb[0].mxu0 %v525
    %v570 = vpop.f32.mrb[0].mxu0
    %v571 = vadd.f32 0.0, %v570
    %v572 = vpop.f32.mrb[0].mxu0
    %v573 = vpop.f32.mrb[0].mxu0
    %v574 = vadd.f32 0.0, %v573
    %v575 = vpop.f32.mrb[0].mxu0
    %576 = vmatprep.mubr.bf16.mxu0 0
    %577 = vmatmul.mubr.bf16.gmra.mrb[0].mxu0 %v528
    %v578 = vpop.f32.mrb[0].mxu0
    %v579 = vadd.f32 0.0, %v578
    %v580 = vpop.f32.mrb[0].mxu0
    %v581 = vpop.f32.mrb[0].mxu0
    %v582 = vadd.f32 0.0, %v581
    %v583 = vpop.f32.mrb[0].mxu0
    %584 = vmatprep.mubr.bf16.mxu0 0
    %585 = vmatmul.mubr.bf16.gmra.mrb[0].mxu0 %v531
    %v586 = vpop.f32.mrb[0].mxu0
    %v587 = vadd.f32 0.0, %v586
    %v588 = vpop.f32.mrb[0].mxu0
    %v589 = vpop.f32.mrb[0].mxu0
    %v590 = vadd.f32 0.0, %v589
    %v591 = vpop.f32.mrb[0].mxu0
    %592 = vmatprep.mubr.bf16.mxu0 0
    %593 = vmatmul.mubr.bf16.gmra.mrb[0].mxu0 %v534
    %v594 = vpop.f32.mrb[0].mxu0
    %v595 = vadd.f32 0.0, %v594
    %v596 = vpop.f32.mrb[0].mxu0
    %v597 = vpop.f32.mrb[0].mxu0
    %v598 = vadd.f32 0.0, %v597
    %v599 = vpop.f32.mrb[0].mxu0
    %600 = vdwg.mxu0
    %v601 = vmax.f32 %v487, %v571
    %v602 = vmax.f32 %v488, %v574
    %v603 = vmax.f32 %v489, %v579
    %v604 = vmax.f32 %v490, %v582
    %v605 = vmax.f32 %v491, %v587
    %v606 = vmax.f32 %v492, %v590
    %v607 = vmax.f32 %v493, %v595
    %v608 = vmax.f32 %v494, %v598
    %s609 = scalar_lea.vmem [#allocation4], 96
    %v610 = vld [vmem:[%s609] sm:$0xf]
    %v611 = vld [vmem:[%s609 + $0x4] sm:$0xf]
    %v612 = vld [vmem:[%s609 + $0x8] sm:$0xf]
    %v613 = vld [vmem:[%s609 + $0xc] sm:$0xf]
    %v614 = vld [vmem:[%s609 + $0x10] sm:$0xf]
    %v615 = vld [vmem:[%s609 + $0x14] sm:$0xf]
    %v616 = vld [vmem:[%s609 + $0x18] sm:$0xf]
    %v617 = vld [vmem:[%s609 + $0x1c] sm:$0xf]
    %v626 = vunpack.c.l.b16 %v610
    %v627 = vunpack.c.l.b16 %v611
    %v628 = vunpack.c.l.b16 %v612
    %v629 = vunpack.c.l.b16 %v613
    %v630 = vunpack.c.l.b16 %v614
    %v631 = vunpack.c.l.b16 %v615
    %v632 = vunpack.c.l.b16 %v616
    %v633 = vunpack.c.l.b16 %v617
    %v634 = vpack.c.b16 %v627, %v626
    %v635 = vpack.c.b16 %v629, %v628
    %v636 = vpack.c.b16 %v631, %v630
    %v637 = vpack.c.b16 %v633, %v632
    %v639 = vsel %vm295, %v634, 0
    %v642 = vsel %vm295, %v635, 0
    %v645 = vsel %vm295, %v636, 0
    %v648 = vsel %vm295, %v637, 0
    %650 = vmatprep.subr.bf16.mxu0 0
    %651 = vmatpush1.bf16.msra.mxu0 %v263
    %652 = vmatprep.subr.bf16.mxu0 0
    %653 = vmatpush1.bf16.msra.mxu0 %v264
    %654 = vmatprep.subr.bf16.mxu0 0
    %655 = vmatpush1.bf16.msra.mxu0 %v265
    %656 = vmatprep.subr.bf16.mxu0 0
    %657 = vmatpush1.bf16.msra.mxu0 %v266
    %658 = vmatprep.subr.bf16.mxu0 0
    %659 = vmatpush1.bf16.msra.mxu0 0
    %660 = vmatprep.subr.bf16.mxu0 0
    %661 = vmatpush1.bf16.msra.mxu0 0
    %662 = vmatprep.subr.bf16.mxu0 0
    %663 = vmatpush1.bf16.msra.mxu0 0
    %664 = vmatprep.subr.bf16.mxu0 0
    %665 = vmatpush1.bf16.msra.mxu0 0
    %666 = vmatprep.subr.bf16.mxu0 0
    %667 = vmatpush1.bf16.msra.mxu0 0
    %668 = vmatprep.subr.bf16.mxu0 0
    %669 = vmatpush1.bf16.msra.mxu0 0
    %670 = vmatprep.subr.bf16.mxu0 0
    %671 = vmatpush1.bf16.msra.mxu0 0
    %672 = vmatprep.subr.bf16.mxu0 0
    %673 = vmatpush1.bf16.msra.mxu0 0
    %674 = vmatprep.subr.bf16.mxu0 0
    %675 = vmatpush1.bf16.msra.mxu0 0
    %676 = vmatprep.subr.bf16.mxu0 0
    %677 = vmatpush1.bf16.msra.mxu0 0
    %678 = vmatprep.subr.bf16.mxu0 0
    %679 = vmatpush1.bf16.msra.mxu0 0
    %680 = vmatprep.subr.bf16.mxu0 0
    %681 = vmatpush1.bf16.msra.mxu0 0
    %682 = vmatprep.mubr.bf16.mxu0 0
    %683 = vmatmul.mubr.bf16.gmra.mrb[0].mxu0 %v639
    %v684 = vpop.f32.mrb[0].mxu0
    %v685 = vadd.f32 0.0, %v684
    %v686 = vpop.f32.mrb[0].mxu0
    %v687 = vpop.f32.mrb[0].mxu0
    %v688 = vadd.f32 0.0, %v687
    %v689 = vpop.f32.mrb[0].mxu0
    %690 = vmatprep.mubr.bf16.mxu0 0
    %691 = vmatmul.mubr.bf16.gmra.mrb[0].mxu0 %v642
    %v692 = vpop.f32.mrb[0].mxu0
    %v693 = vadd.f32 0.0, %v692
    %v694 = vpop.f32.mrb[0].mxu0
    %v695 = vpop.f32.mrb[0].mxu0
    %v696 = vadd.f32 0.0, %v695
    %v697 = vpop.f32.mrb[0].mxu0
    %698 = vmatprep.mubr.bf16.mxu0 0
    %699 = vmatmul.mubr.bf16.gmra.mrb[0].mxu0 %v645
    %v700 = vpop.f32.mrb[0].mxu0
    %v701 = vadd.f32 0.0, %v700
    %v702 = vpop.f32.mrb[0].mxu0
    %v703 = vpop.f32.mrb[0].mxu0
    %v704 = vadd.f32 0.0, %v703
    %v705 = vpop.f32.mrb[0].mxu0
    %706 = vmatprep.mubr.bf16.mxu0 0
    %707 = vmatmul.mubr.bf16.gmra.mrb[0].mxu0 %v648
    %v708 = vpop.f32.mrb[0].mxu0
    %v709 = vadd.f32 0.0, %v708
    %v710 = vpop.f32.mrb[0].mxu0
    %v711 = vpop.f32.mrb[0].mxu0
    %v712 = vadd.f32 0.0, %v711
    %v713 = vpop.f32.mrb[0].mxu0
    %714 = vdwg.mxu0
    %v715 = vmax.f32 %v601, %v685
    %v716 = vmax.f32 %v602, %v688
    %v717 = vmax.f32 %v603, %v693
    %v718 = vmax.f32 %v604, %v696
    %v719 = vmax.f32 %v605, %v701
    %v720 = vmax.f32 %v606, %v704
    %v721 = vmax.f32 %v607, %v709
    %v722 = vmax.f32 %v608, %v712
    %s723 = scalar_lea.vmem [#allocation4], 128
    %v724 = vld [vmem:[%s723] sm:$0xf]
    %v725 = vld [vmem:[%s723 + $0x4] sm:$0xf]
    %v726 = vld [vmem:[%s723 + $0x8] sm:$0xf]
    %v727 = vld [vmem:[%s723 + $0xc] sm:$0xf]
    %v728 = vld [vmem:[%s723 + $0x10] sm:$0xf]
    %v729 = vld [vmem:[%s723 + $0x14] sm:$0xf]
    %v730 = vld [vmem:[%s723 + $0x18] sm:$0xf]
    %v731 = vld [vmem:[%s723 + $0x1c] sm:$0xf]
    %v740 = vunpack.c.l.b16 %v724
    %v741 = vunpack.c.l.b16 %v725
    %v742 = vunpack.c.l.b16 %v726
    %v743 = vunpack.c.l.b16 %v727
    %v744 = vunpack.c.l.b16 %v728
    %v745 = vunpack.c.l.b16 %v729
    %v746 = vunpack.c.l.b16 %v730
    %v747 = vunpack.c.l.b16 %v731
    %v748 = vpack.c.b16 %v741, %v740
    %v749 = vpack.c.b16 %v743, %v742
    %v750 = vpack.c.b16 %v745, %v744
    %v751 = vpack.c.b16 %v747, %v746
    %v753 = vsel %vm295, %v748, 0
    %v756 = vsel %vm295, %v749, 0
    %v759 = vsel %vm295, %v750, 0
    %v762 = vsel %vm295, %v751, 0
    %764 = vmatprep.subr.bf16.mxu0 0
    %765 = vmatpush1.bf16.msra.mxu0 %v263
    %766 = vmatprep.subr.bf16.mxu0 0
    %767 = vmatpush1.bf16.msra.mxu0 %v264
    %768 = vmatprep.subr.bf16.mxu0 0
    %769 = vmatpush1.bf16.msra.mxu0 %v265
    %770 = vmatprep.subr.bf16.mxu0 0
    %771 = vmatpush1.bf16.msra.mxu0 %v266
    %772 = vmatprep.subr.bf16.mxu0 0
    %773 = vmatpush1.bf16.msra.mxu0 0
    %774 = vmatprep.subr.bf16.mxu0 0
    %775 = vmatpush1.bf16.msra.mxu0 0
    %776 = vmatprep.subr.bf16.mxu0 0
    %777 = vmatpush1.bf16.msra.mxu0 0
    %778 = vmatprep.subr.bf16.mxu0 0
    %779 = vmatpush1.bf16.msra.mxu0 0
    %780 = vmatprep.subr.bf16.mxu0 0
    %781 = vmatpush1.bf16.msra.mxu0 0
    %782 = vmatprep.subr.bf16.mxu0 0
    %783 = vmatpush1.bf16.msra.mxu0 0
    %784 = vmatprep.subr.bf16.mxu0 0
    %785 = vmatpush1.bf16.msra.mxu0 0
    %786 = vmatprep.subr.bf16.mxu0 0
    %787 = vmatpush1.bf16.msra.mxu0 0
    %788 = vmatprep.subr.bf16.mxu0 0
    %789 = vmatpush1.bf16.msra.mxu0 0
    %790 = vmatprep.subr.bf16.mxu0 0
    %791 = vmatpush1.bf16.msra.mxu0 0
    %792 = vmatprep.subr.bf16.mxu0 0
    %793 = vmatpush1.bf16.msra.mxu0 0
    %794 = vmatprep.subr.bf16.mxu0 0
    %795 = vmatpush1.bf16.msra.mxu0 0
    %796 = vmatprep.mubr.bf16.mxu0 0
    %797 = vmatmul.mubr.bf16.gmra.mrb[0].mxu0 %v753
    %v798 = vpop.f32.mrb[0].mxu0
    %v799 = vadd.f32 0.0, %v798
    %v800 = vpop.f32.mrb[0].mxu0
    %v801 = vpop.f32.mrb[0].mxu0
    %v802 = vadd.f32 0.0, %v801
    %v803 = vpop.f32.mrb[0].mxu0
    %804 = vmatprep.mubr.bf16.mxu0 0
    %805 = vmatmul.mubr.bf16.gmra.mrb[0].mxu0 %v756
    %v806 = vpop.f32.mrb[0].mxu0
    %v807 = vadd.f32 0.0, %v806
    %v808 = vpop.f32.mrb[0].mxu0
    %v809 = vpop.f32.mrb[0].mxu0
    %v810 = vadd.f32 0.0, %v809
    %v811 = vpop.f32.mrb[0].mxu0
    %812 = vmatprep.mubr.bf16.mxu0 0
    %813 = vmatmul.mubr.bf16.gmra.mrb[0].mxu0 %v759
    %v814 = vpop.f32.mrb[0].mxu0
    %v815 = vadd.f32 0.0, %v814
    %v816 = vpop.f32.mrb[0].mxu0
    %v817 = vpop.f32.mrb[0].mxu0
    %v818 = vadd.f32 0.0, %v817
    %v819 = vpop.f32.mrb[0].mxu0
    %820 = vmatprep.mubr.bf16.mxu0 0
    %821 = vmatmul.mubr.bf16.gmra.mrb[0].mxu0 %v762
    %v822 = vpop.f32.mrb[0].mxu0
    %v823 = vadd.f32 0.0, %v822
    %v824 = vpop.f32.mrb[0].mxu0
    %v825 = vpop.f32.mrb[0].mxu0
    %v826 = vadd.f32 0.0, %v825
    %v827 = vpop.f32.mrb[0].mxu0
    %828 = vdwg.mxu0
    %v829 = vmax.f32 %v715, %v799
    %v830 = vmax.f32 %v716, %v802
    %v831 = vmax.f32 %v717, %v807
    %v832 = vmax.f32 %v718, %v810
    %v833 = vmax.f32 %v719, %v815
    %v834 = vmax.f32 %v720, %v818
    %v835 = vmax.f32 %v721, %v823
    %v836 = vmax.f32 %v722, %v826
    %s837 = smul.u32 0, 64
    %s838 = scalar_lea.vmem [#allocation2], %s837
    %v839 = vld [vmem:[%s838] sm:$0xff]
    %v840 = vld [vmem:[%s838 + $0x8] sm:$0xff]
    %v841 = vld [vmem:[%s838 + $0x10] sm:$0xff]
    %v842 = vld [vmem:[%s838 + $0x18] sm:$0xff]
    %v843 = vld [vmem:[%s838 + $0x20] sm:$0xff]
    %v844 = vld [vmem:[%s838 + $0x28] sm:$0xff]
    %v845 = vld [vmem:[%s838 + $0x30] sm:$0xff]
    %v846 = vld [vmem:[%s838 + $0x38] sm:$0xff]
    %v847 = vpack.c.bf16 %v840, %v839
    %v848 = vpack.c.bf16 %v842, %v841
    %v849 = vpack.c.bf16 %v844, %v843
    %v850 = vpack.c.bf16 %v846, %v845
    %v851 = vld [vmem:[#allocation7] sm:$0xf]
    %v852 = vld [vmem:[#allocation7 + $0x4] sm:$0xf]
    %v853 = vld [vmem:[#allocation7 + $0x8] sm:$0xf]
    %v854 = vld [vmem:[#allocation7 + $0xc] sm:$0xf]
    %v855 = vld [vmem:[#allocation7 + $0x10] sm:$0xf]
    %v856 = vld [vmem:[#allocation7 + $0x14] sm:$0xf]
    %v857 = vld [vmem:[#allocation7 + $0x18] sm:$0xf]
    %v858 = vld [vmem:[#allocation7 + $0x1c] sm:$0xf]
    %v859 = vld [vmem:[#allocation7 + $0x20] sm:$0xf]
    %v860 = vld [vmem:[#allocation7 + $0x24] sm:$0xf]
    %v861 = vld [vmem:[#allocation7 + $0x28] sm:$0xf]
    %v862 = vld [vmem:[#allocation7 + $0x2c] sm:$0xf]
    %v863 = vld [vmem:[#allocation7 + $0x30] sm:$0xf]
    %v864 = vld [vmem:[#allocation7 + $0x34] sm:$0xf]
    %v865 = vld [vmem:[#allocation7 + $0x38] sm:$0xf]
    %v866 = vld [vmem:[#allocation7 + $0x3c] sm:$0xf]
    %v867 = vpack.c.bf16 %v830, %v829
    %v868 = vpack.c.bf16 %v832, %v831
    %v869 = vpack.c.bf16 %v834, %v833
    %v870 = vpack.c.bf16 %v836, %v835
    %v871 = vld [vmem:[#allocation9] sm:$0xf]
    %v872 = vld [vmem:[#allocation9 + $0x4] sm:$0xf]
    %v873 = vld [vmem:[#allocation9 + $0x8] sm:$0xf]
    %v874 = vld [vmem:[#allocation9 + $0xc] sm:$0xf]
    %v875 = vld [vmem:[#allocation9 + $0x10] sm:$0xf]
    %v876 = vld [vmem:[#allocation9 + $0x14] sm:$0xf]
    %v877 = vld [vmem:[#allocation9 + $0x18] sm:$0xf]
    %v878 = vld [vmem:[#allocation9 + $0x1c] sm:$0xf]
    %v879 = vld [vmem:[#allocation9 + $0x20] sm:$0xf]
    %v880 = vld [vmem:[#allocation9 + $0x24] sm:$0xf]
    %v881 = vld [vmem:[#allocation9 + $0x28] sm:$0xf]
    %v882 = vld [vmem:[#allocation9 + $0x2c] sm:$0xf]
    %v883 = vld [vmem:[#allocation9 + $0x30] sm:$0xf]
    %v884 = vld [vmem:[#allocation9 + $0x34] sm:$0xf]
    %v885 = vld [vmem:[#allocation9 + $0x38] sm:$0xf]
    %v886 = vld [vmem:[#allocation9 + $0x3c] sm:$0xf]
    %v903 = vunpack.c.l.b16 %v871
    %v904 = vunpack.c.l.b16 %v872
    %v905 = vunpack.c.l.b16 %v873
    %v906 = vunpack.c.l.b16 %v874
    %v907 = vunpack.c.l.b16 %v875
    %v908 = vunpack.c.l.b16 %v876
    %v909 = vunpack.c.l.b16 %v877
    %v910 = vunpack.c.l.b16 %v878
    %v911 = vunpack.c.l.b16 %v879
    %v912 = vunpack.c.l.b16 %v880
    %v913 = vunpack.c.l.b16 %v881
    %v914 = vunpack.c.l.b16 %v882
    %v915 = vunpack.c.l.b16 %v883
    %v916 = vunpack.c.l.b16 %v884
    %v917 = vunpack.c.l.b16 %v885
    %v918 = vunpack.c.l.b16 %v886
    %v919 = vpack.c.b16 %v904, %v903
    %v920 = vpack.c.b16 %v906, %v905
    %v921 = vpack.c.b16 %v908, %v907
    %v922 = vpack.c.b16 %v910, %v909
    %v923 = vpack.c.b16 %v912, %v911
    %v924 = vpack.c.b16 %v914, %v913
    %v925 = vpack.c.b16 %v916, %v915
    %v926 = vpack.c.b16 %v918, %v917
    %935 = vmatprep.subr.bf16.mxu0 0
    %936 = vmatpush1.bf16.msra.mxu0 %v919
    %937 = vmatprep.subr.bf16.mxu0 0
    %938 = vmatpush1.bf16.msra.mxu0 %v920
    %939 = vmatprep.subr.bf16.mxu0 0
    %940 = vmatpush1.bf16.msra.mxu0 %v921
    %941 = vmatprep.subr.bf16.mxu0 0
    %942 = vmatpush1.bf16.msra.mxu0 %v922
    %943 = vmatprep.subr.bf16.mxu0 0
    %944 = vmatpush1.bf16.msra.mxu0 %v923
    %945 = vmatprep.subr.bf16.mxu0 0
    %946 = vmatpush1.bf16.msra.mxu0 %v924
    %947 = vmatprep.subr.bf16.mxu0 0
    %948 = vmatpush1.bf16.msra.mxu0 %v925
    %949 = vmatprep.subr.bf16.mxu0 0
    %950 = vmatpush1.bf16.msra.mxu0 %v926
    %951 = vmatprep.subr.bf16.mxu0 0
    %952 = vmatpush1.bf16.msra.mxu0 0
    %953 = vmatprep.subr.bf16.mxu0 0
    %954 = vmatpush1.bf16.msra.mxu0 0
    %955 = vmatprep.subr.bf16.mxu0 0
    %956 = vmatpush1.bf16.msra.mxu0 0
    %957 = vmatprep.subr.bf16.mxu0 0
    %958 = vmatpush1.bf16.msra.mxu0 0
    %959 = vmatprep.subr.bf16.mxu0 0
    %960 = vmatpush1.bf16.msra.mxu0 0
    %961 = vmatprep.subr.bf16.mxu0 0
    %962 = vmatpush1.bf16.msra.mxu0 0
    %963 = vmatprep.subr.bf16.mxu0 0
    %964 = vmatpush1.bf16.msra.mxu0 0
    %965 = vmatprep.subr.bf16.mxu0 0
    %966 = vmatpush1.bf16.msra.mxu0 0
    %967 = vmatprep.mubr.bf16.mxu0 0
    %968 = vmatmul.mubr.bf16.gmra.mrb[0].mxu0 %v867
    %v969 = vpop.f32.mrb[0].mxu0
    %v970 = vadd.f32 0.0, %v969
    %v971 = vpop.f32.mrb[0].mxu0
    %v972 = vpop.f32.mrb[0].mxu0
    %v973 = vadd.f32 0.0, %v972
    %v974 = vpop.f32.mrb[0].mxu0
    %975 = vmatprep.mubr.bf16.mxu0 0
    %976 = vmatmul.mubr.bf16.gmra.mrb[0].mxu0 %v868
    %v977 = vpop.f32.mrb[0].mxu0
    %v978 = vadd.f32 0.0, %v977
    %v979 = vpop.f32.mrb[0].mxu0
    %v980 = vpop.f32.mrb[0].mxu0
    %v981 = vadd.f32 0.0, %v980
    %v982 = vpop.f32.mrb[0].mxu0
    %983 = vmatprep.mubr.bf16.mxu0 0
    %984 = vmatmul.mubr.bf16.gmra.mrb[0].mxu0 %v869
    %v985 = vpop.f32.mrb[0].mxu0
    %v986 = vadd.f32 0.0, %v985
    %v987 = vpop.f32.mrb[0].mxu0
    %v988 = vpop.f32.mrb[0].mxu0
    %v989 = vadd.f32 0.0, %v988
    %v990 = vpop.f32.mrb[0].mxu0
    %991 = vmatprep.mubr.bf16.mxu0 0
    %992 = vmatmul.mubr.bf16.gmra.mrb[0].mxu0 %v870
    %v993 = vpop.f32.mrb[0].mxu0
    %v994 = vadd.f32 0.0, %v993
    %v995 = vpop.f32.mrb[0].mxu0
    %v996 = vpop.f32.mrb[0].mxu0
    %v997 = vadd.f32 0.0, %v996
    %v998 = vpop.f32.mrb[0].mxu0
    %999 = vdwg.mxu0
    %v1016 = vunpack.c.l.b16 %v851
    %v1017 = vunpack.c.l.b16 %v852
    %v1018 = vunpack.c.l.b16 %v853
    %v1019 = vunpack.c.l.b16 %v854
    %v1020 = vunpack.c.l.b16 %v855
    %v1021 = vunpack.c.l.b16 %v856
    %v1022 = vunpack.c.l.b16 %v857
    %v1023 = vunpack.c.l.b16 %v858
    %v1024 = vunpack.c.l.b16 %v859
    %v1025 = vunpack.c.l.b16 %v860
    %v1026 = vunpack.c.l.b16 %v861
    %v1027 = vunpack.c.l.b16 %v862
    %v1028 = vunpack.c.l.b16 %v863
    %v1029 = vunpack.c.l.b16 %v864
    %v1030 = vunpack.c.l.b16 %v865
    %v1031 = vunpack.c.l.b16 %v866
    %v1032 = vpack.c.b16 %v1017, %v1016
    %v1033 = vpack.c.b16 %v1019, %v1018
    %v1034 = vpack.c.b16 %v1021, %v1020
    %v1035 = vpack.c.b16 %v1023, %v1022
    %v1036 = vpack.c.b16 %v1025, %v1024
    %v1037 = vpack.c.b16 %v1027, %v1026
    %v1038 = vpack.c.b16 %v1029, %v1028
    %v1039 = vpack.c.b16 %v1031, %v1030
    %1048 = vmatprep.subr.bf16.mxu0 0
    %1049 = vmatpush1.bf16.msra.mxu0 %v1032
    %1050 = vmatprep.subr.bf16.mxu0 0
    %1051 = vmatpush1.bf16.msra.mxu0 %v1033
    %1052 = vmatprep.subr.bf16.mxu0 0
    %1053 = vmatpush1.bf16.msra.mxu0 %v1034
    %1054 = vmatprep.subr.bf16.mxu0 0
    %1055 = vmatpush1.bf16.msra.mxu0 %v1035
    %1056 = vmatprep.subr.bf16.mxu0 0
    %1057 = vmatpush1.bf16.msra.mxu0 %v1036
    %1058 = vmatprep.subr.bf16.mxu0 0
    %1059 = vmatpush1.bf16.msra.mxu0 %v1037
    %1060 = vmatprep.subr.bf16.mxu0 0
    %1061 = vmatpush1.bf16.msra.mxu0 %v1038
    %1062 = vmatprep.subr.bf16.mxu0 0
    %1063 = vmatpush1.bf16.msra.mxu0 %v1039
    %1064 = vmatprep.subr.bf16.mxu0 0
    %1065 = vmatpush1.bf16.msra.mxu0 0
    %1066 = vmatprep.subr.bf16.mxu0 0
    %1067 = vmatpush1.bf16.msra.mxu0 0
    %1068 = vmatprep.subr.bf16.mxu0 0
    %1069 = vmatpush1.bf16.msra.mxu0 0
    %1070 = vmatprep.subr.bf16.mxu0 0
    %1071 = vmatpush1.bf16.msra.mxu0 0
    %1072 = vmatprep.subr.bf16.mxu0 0
    %1073 = vmatpush1.bf16.msra.mxu0 0
    %1074 = vmatprep.subr.bf16.mxu0 0
    %1075 = vmatpush1.bf16.msra.mxu0 0
    %1076 = vmatprep.subr.bf16.mxu0 0
    %1077 = vmatpush1.bf16.msra.mxu0 0
    %1078 = vmatprep.subr.bf16.mxu0 0
    %1079 = vmatpush1.bf16.msra.mxu0 0
    %1080 = vmatprep.mubr.bf16.mxu0 0
    %1081 = vmatmul.mubr.bf16.gmra.mrb[0].mxu0 %v847
    %v1082 = vpop.f32.mrb[0].mxu0
    %v1083 = vadd.f32 %v970, %v1082
    %v1084 = vpop.f32.mrb[0].mxu0
    %v1085 = vpop.f32.mrb[0].mxu0
    %v1086 = vadd.f32 %v973, %v1085
    %v1087 = vpop.f32.mrb[0].mxu0
    %1088 = vmatprep.mubr.bf16.mxu0 0
    %1089 = vmatmul.mubr.bf16.gmra.mrb[0].mxu0 %v848
    %v1090 = vpop.f32.mrb[0].mxu0
    %v1091 = vadd.f32 %v978, %v1090
    %v1092 = vpop.f32.mrb[0].mxu0
    %v1093 = vpop.f32.mrb[0].mxu0
    %v1094 = vadd.f32 %v981, %v1093
    %v1095 = vpop.f32.mrb[0].mxu0
    %1096 = vmatprep.mubr.bf16.mxu0 0
    %1097 = vmatmul.mubr.bf16.gmra.mrb[0].mxu0 %v849
    %v1098 = vpop.f32.mrb[0].mxu0
    %v1099 = vadd.f32 %v986, %v1098
    %v1100 = vpop.f32.mrb[0].mxu0
    %v1101 = vpop.f32.mrb[0].mxu0
    %v1102 = vadd.f32 %v989, %v1101
    %v1103 = vpop.f32.mrb[0].mxu0
    %1104 = vmatprep.mubr.bf16.mxu0 0
    %1105 = vmatmul.mubr.bf16.gmra.mrb[0].mxu0 %v850
    %v1106 = vpop.f32.mrb[0].mxu0
    %v1107 = vadd.f32 %v994, %v1106
    %v1108 = vpop.f32.mrb[0].mxu0
    %v1109 = vpop.f32.mrb[0].mxu0
    %v1110 = vadd.f32 %v997, %v1109
    %v1111 = vpop.f32.mrb[0].mxu0
    %1112 = vdwg.mxu0
    %v1113 = vld [vmem:[%s6] sm:$0x1]
    %v1115 = vlaneseq
    %v1116 = vshrl.u32 %v1115, 7
    %v1117 = vsub.s32 0, %v1116
    %v1118 = vrot.slane %v1113, %v1117
    %v1120 = vadd.f32 %v1083, %v1118
    %v1121 = vadd.f32 %v1086, %v1118
    %v1122 = vadd.f32 %v1091, %v1118
    %v1123 = vadd.f32 %v1094, %v1118
    %v1124 = vadd.f32 %v1099, %v1118
    %v1125 = vadd.f32 %v1102, %v1118
    %v1126 = vadd.f32 %v1107, %v1118
    %v1127 = vadd.f32 %v1110, %v1118
    %v1128 = vmax.f32 %v1120, 0.0
    %v1129 = vmax.f32 %v1121, 0.0
    %v1130 = vmax.f32 %v1122, 0.0
    %v1131 = vmax.f32 %v1123, 0.0
    %v1132 = vmax.f32 %v1124, 0.0
    %v1133 = vmax.f32 %v1125, 0.0
    %v1134 = vmax.f32 %v1126, 0.0
    %v1135 = vmax.f32 %v1127, 0.0
    %v1136 = vld [vmem:[%s9] sm:$0x1]
    %v1138 = vlaneseq
    %v1139 = vshrl.u32 %v1138, 7
    %v1140 = vsub.s32 0, %v1139
    %v1141 = vrot.slane %v1136, %v1140
    %v1143 = vsub.f32 %v1128, %v1141
    %v1144 = vsub.f32 %v1129, %v1141
    %v1145 = vsub.f32 %v1130, %v1141
    %v1146 = vsub.f32 %v1131, %v1141
    %v1147 = vsub.f32 %v1132, %v1141
    %v1148 = vsub.f32 %v1133, %v1141
    %v1149 = vsub.f32 %v1134, %v1141
    %v1150 = vsub.f32 %v1135, %v1141
    %v1151 = vld [vmem:[%s10] sm:$0x1]
    %v1152 = vadd.f32 %v1151, 1e-05
    %v1153 = vrsqrt.pop %v1152
    %v1155 = vlaneseq
    %v1156 = vshrl.u32 %v1155, 7
    %v1157 = vsub.s32 0, %v1156
    %v1158 = vrot.slane %v1153, %v1157
    %v1160 = vmul.f32 %v1143, %v1158
    %v1161 = vmul.f32 %v1144, %v1158
    %v1162 = vmul.f32 %v1145, %v1158
    %v1163 = vmul.f32 %v1146, %v1158
    %v1164 = vmul.f32 %v1147, %v1158
    %v1165 = vmul.f32 %v1148, %v1158
    %v1166 = vmul.f32 %v1149, %v1158
    %v1167 = vmul.f32 %v1150, %v1158
    %v1168 = vld [vmem:[%s7] sm:$0x1]
    %v1170 = vlaneseq
    %v1171 = vshrl.u32 %v1170, 7
    %v1172 = vsub.s32 0, %v1171
    %v1173 = vrot.slane %v1168, %v1172
    %v1175 = vmul.f32 %v1160, %v1173
    %v1176 = vmul.f32 %v1161, %v1173
    %v1177 = vmul.f32 %v1162, %v1173
    %v1178 = vmul.f32 %v1163, %v1173
    %v1179 = vmul.f32 %v1164, %v1173
    %v1180 = vmul.f32 %v1165, %v1173
    %v1181 = vmul.f32 %v1166, %v1173
    %v1182 = vmul.f32 %v1167, %v1173
    %v1183 = vld [vmem:[%s8] sm:$0x1]
    %v1185 = vlaneseq
    %v1186 = vshrl.u32 %v1185, 7
    %v1187 = vsub.s32 0, %v1186
    %v1188 = vrot.slane %v1183, %v1187
    %v1190 = vadd.f32 %v1175, %v1188
    %v1191 = vadd.f32 %v1176, %v1188
    %v1192 = vadd.f32 %v1177, %v1188
    %v1193 = vadd.f32 %v1178, %v1188
    %v1194 = vadd.f32 %v1179, %v1188
    %v1195 = vadd.f32 %v1180, %v1188
    %v1196 = vadd.f32 %v1181, %v1188
    %v1197 = vadd.f32 %v1182, %v1188
    %v1198 = vmul.f32 %v1190, %v1190
    %v1199 = vmul.f32 %v1191, %v1191
    %v1200 = vmul.f32 %v1192, %v1192
    %v1201 = vmul.f32 %v1193, %v1193
    %v1202 = vmul.f32 %v1194, %v1194
    %v1203 = vmul.f32 %v1195, %v1195
    %v1204 = vmul.f32 %v1196, %v1196
    %v1205 = vmul.f32 %v1197, %v1197
    %1206 = vadd.xlane.f32.xlu0 %v1198
    %v1207 = vpop.xlane.xlu0 %1206
    %1208 = vadd.xlane.f32.xlu0 %v1199
    %v1209 = vpop.xlane.xlu0 %1208
    %1210 = vadd.xlane.f32.xlu0 %v1200
    %v1211 = vpop.xlane.xlu0 %1210
    %1212 = vadd.xlane.f32.xlu0 %v1201
    %v1213 = vpop.xlane.xlu0 %1212
    %1214 = vadd.xlane.f32.xlu0 %v1202
    %v1215 = vpop.xlane.xlu0 %1214
    %1216 = vadd.xlane.f32.xlu0 %v1203
    %v1217 = vpop.xlane.xlu0 %1216
    %1218 = vadd.xlane.f32.xlu0 %v1204
    %v1219 = vpop.xlane.xlu0 %1218
    %1220 = vadd.xlane.f32.xlu0 %v1205
    %v1221 = vpop.xlane.xlu0 %1220
    %v1222 = vrsqrt.pop %v1207
    %v1223 = vmul.f32 %v1207, %v1222
    %vm1224 = vcmp.eq.f32.partialorder %v1207, inf
    %v1225 = vsel %vm1224, %v1207, %v1223
    %vm1226 = vcmp.eq.f32.partialorder %v1207, 0.0
    %v1227 = vand.u32 %v1207, 2147483648
    %v1228 = vsel %vm1226, %v1227, %v1225
    %v1229 = vrsqrt.pop %v1209
    %v1230 = vmul.f32 %v1209, %v1229
    %vm1231 = vcmp.eq.f32.partialorder %v1209, inf
    %v1232 = vsel %vm1231, %v1209, %v1230
    %vm1233 = vcmp.eq.f32.partialorder %v1209, 0.0
    %v1234 = vand.u32 %v1209, 2147483648
    %v1235 = vsel %vm1233, %v1234, %v1232
    %v1236 = vrsqrt.pop %v1211
    %v1237 = vmul.f32 %v1211, %v1236
    %vm1238 = vcmp.eq.f32.partialorder %v1211, inf
    %v1239 = vsel %vm1238, %v1211, %v1237
    %vm1240 = vcmp.eq.f32.partialorder %v1211, 0.0
    %v1241 = vand.u32 %v1211, 2147483648
    %v1242 = vsel %vm1240, %v1241, %v1239
    %v1243 = vrsqrt.pop %v1213
    %v1244 = vmul.f32 %v1213, %v1243
    %vm1245 = vcmp.eq.f32.partialorder %v1213, inf
    %v1246 = vsel %vm1245, %v1213, %v1244
    %vm1247 = vcmp.eq.f32.partialorder %v1213, 0.0
    %v1248 = vand.u32 %v1213, 2147483648
    %v1249 = vsel %vm1247, %v1248, %v1246
    %v1250 = vrsqrt.pop %v1215
    %v1251 = vmul.f32 %v1215, %v1250
    %vm1252 = vcmp.eq.f32.partialorder %v1215, inf
    %v1253 = vsel %vm1252, %v1215, %v1251
    %vm1254 = vcmp.eq.f32.partialorder %v1215, 0.0
    %v1255 = vand.u32 %v1215, 2147483648
    %v1256 = vsel %vm1254, %v1255, %v1253
    %v1257 = vrsqrt.pop %v1217
    %v1258 = vmul.f32 %v1217, %v1257
    %vm1259 = vcmp.eq.f32.partialorder %v1217, inf
    %v1260 = vsel %vm1259, %v1217, %v1258
    %vm1261 = vcmp.eq.f32.partialorder %v1217, 0.0
    %v1262 = vand.u32 %v1217, 2147483648
    %v1263 = vsel %vm1261, %v1262, %v1260
    %v1264 = vrsqrt.pop %v1219
    %v1265 = vmul.f32 %v1219, %v1264
    %vm1266 = vcmp.eq.f32.partialorder %v1219, inf
    %v1267 = vsel %vm1266, %v1219, %v1265
    %vm1268 = vcmp.eq.f32.partialorder %v1219, 0.0
    %v1269 = vand.u32 %v1219, 2147483648
    %v1270 = vsel %vm1268, %v1269, %v1267
    %v1271 = vrsqrt.pop %v1221
    %v1272 = vmul.f32 %v1221, %v1271
    %vm1273 = vcmp.eq.f32.partialorder %v1221, inf
    %v1274 = vsel %vm1273, %v1221, %v1272
    %vm1275 = vcmp.eq.f32.partialorder %v1221, 0.0
    %v1276 = vand.u32 %v1221, 2147483648
    %v1277 = vsel %vm1275, %v1276, %v1274
    %v1278 = vadd.f32 %v1228, 1e-06
    %v1279 = vadd.f32 %v1235, 1e-06
    %v1280 = vadd.f32 %v1242, 1e-06
    %v1281 = vadd.f32 %v1249, 1e-06
    %v1282 = vadd.f32 %v1256, 1e-06
    %v1283 = vadd.f32 %v1263, 1e-06
    %v1284 = vadd.f32 %v1270, 1e-06
    %v1285 = vadd.f32 %v1277, 1e-06
    %v1286 = vrcp.pop %v1278
    %v1287 = vrcp.pop %v1279
    %v1288 = vrcp.pop %v1280
    %v1289 = vrcp.pop %v1281
    %v1290 = vrcp.pop %v1282
    %v1291 = vrcp.pop %v1283
    %v1292 = vrcp.pop %v1284
    %v1293 = vrcp.pop %v1285
    %v1294 = vmul.f32 %v1190, %v1286
    %v1295 = vmul.f32 %v1191, %v1287
    %v1296 = vmul.f32 %v1192, %v1288
    %v1297 = vmul.f32 %v1193, %v1289
    %v1298 = vmul.f32 %v1194, %v1290
    %v1299 = vmul.f32 %v1195, %v1291
    %v1300 = vmul.f32 %v1196, %v1292
    %v1301 = vmul.f32 %v1197, %v1293
    %1302 = vst [vmem:[%s11] sm:$0xff] %v1294
    %1303 = vst [vmem:[%s11 + $0x8] sm:$0xff] %v1295
    %1304 = vst [vmem:[%s11 + $0x10] sm:$0xff] %v1296
    %1305 = vst [vmem:[%s11 + $0x18] sm:$0xff] %v1297
    %1306 = vst [vmem:[%s11 + $0x20] sm:$0xff] %v1298
    %1307 = vst [vmem:[%s11 + $0x28] sm:$0xff] %v1299
    %1308 = vst [vmem:[%s11 + $0x30] sm:$0xff] %v1300
    %1309 = vst [vmem:[%s11 + $0x38] sm:$0xff] %v1301
    // Predicated region
    $region66: #{graphsage_forward.2} parent=1 // pred_check
      _
    $region67: #{graphsage_forward.2} parent=1 // pred_check_branch
      %1311 = sbr.rel (0) target = $region69
    $region68: #{graphsage_forward.2} parent=1 // pred_region
      _
    $region69: #{graphsage_forward.2} parent=1 // pred_fallthru
      _
    // Predicated region
    $region70: #{graphsage_forward.2} parent=1 // pred_check
      _
    $region71: #{graphsage_forward.2} parent=1 // pred_check_branch
      %1313 = sbr.rel (0) target = $region73
    $region72: #{graphsage_forward.2} parent=1 // pred_region
      _
    $region73: #{graphsage_forward.2} parent=1 // pred_fallthru
      _
    %1314 = vsyncpa [#allocation3], 1
    %1315 = vsyncpa [#allocation5], 1
    %1316 = vsyncpa [#allocation8], 1

</llo_original>
